<compile_context>
chip_gen: v5e
topology: v5e:2x2
jax: 0.10.0
libtpu: 0.0.40
codegen_flags: <defaults>
</compile_context>

<pallas_src>
import math

import numpy as np
import jax
import jax.numpy as jnp
from jax.experimental import pallas as pl
from jax.experimental.pallas import tpu as pltpu

BN_EPS = 1e-5


# --------------------------------------------------------------------------- #
# Host-side parameter packing (done ONCE, outside the per-step forward)
# --------------------------------------------------------------------------- #
def pack_params(conv_params, L_in, w1, b1, w2, b2, w_dtype=jnp.bfloat16):
    """Fold BN(eval) into the conv weights, build per-tap (C_in, C_out) matrices,
    reorder FC1 for the kernel's (position, channel) flatten, pad FC2 to 128 lanes."""
    packed = []
    for p in conv_params:
        gamma, beta = np.asarray(p["gamma"]), np.asarray(p["beta"])
        mean, var = np.asarray(p["mean"]), np.asarray(p["var"])
        scale = gamma / np.sqrt(var + BN_EPS)
        w = np.asarray(p["w"]) * scale[:, None, None]            # (Co, Ci, 3), BN folded
        b = beta + (np.asarray(p["b"]) - mean) * scale           # (Co,)
        # tap k multiplies x[l + k - 1]  (k=0 -> offset -1, k=1 -> 0, k=2 -> +1)
        taps = np.stack([w[:, :, k].T for k in range(3)], axis=0)  # (3, Ci, Co)
        packed += [jnp.asarray(taps, w_dtype),
                   jnp.asarray(b[None, :], jnp.float32)]

    # FC1: torch flat index = c*Lf + l  (NCL flatten).  Kernel accumulates per position l,
    # so repack as (Lf, C3, hidden).
    w1 = np.asarray(w1)
    n_hidden, feat = w1.shape
    Lf = L_in // 4                                               # two MaxPool1d(2) stages
    C3 = feat // Lf
    assert C3 * Lf == feat, "classifier in_features must equal C3 * (L_in // 4)"
    w1p = w1.reshape(n_hidden, C3, Lf).transpose(2, 1, 0)        # (Lf, C3, hidden)
    packed += [jnp.asarray(w1p, w_dtype),
               jnp.asarray(np.asarray(b1)[None, :], jnp.float32)]

    # FC2: pre-transpose and pad the class dim to 128 so the final store is lane-dense.
    w2 = np.asarray(w2)
    num_classes = w2.shape[0]
    NP = 128
    w2p = np.zeros((w2.shape[1], NP), np.float32)
    w2p[:, :num_classes] = w2.T
    b2p = np.zeros((1, NP), np.float32)
    b2p[0, :num_classes] = np.asarray(b2)
    packed += [jnp.asarray(w2p, w_dtype), jnp.asarray(b2p, jnp.float32)]
    return packed


# --------------------------------------------------------------------------- #
# Fused kernel
# --------------------------------------------------------------------------- #
def _fused_vgg_kernel(x_ref,
                      c1w_ref, c1b_ref,
                      c2w_ref, c2b_ref,
                      c3w_ref, c3b_ref,
                      f1w_ref, f1b_ref,
                      f2w_ref, f2b_ref,
                      out_ref):
    CD = jnp.bfloat16
    BM = out_ref.shape[0]                 # batch rows in this grid step
    n_pos = f1w_ref.shape[0]              # positions after the two pools (L0 // 4)
    S = n_pos * BM                        # rows per position-decimated stream

    def mm(a, w):                         # bf16 MXU operands, f32 accumulation
        return jnp.dot(a, w, preferred_element_type=jnp.float32)

    def prev_blk(v):                      # position block j <- j-1 ('same' pad: zero at j==0)
        pad = jnp.zeros((BM,) + v.shape[1:], v.dtype)
        return jnp.concatenate([pad, v[:-BM]], axis=0)

    def next_blk(v):                      # position block j <- j+1 (zero at last block)
        pad = jnp.zeros((BM,) + v.shape[1:], v.dtype)
        return jnp.concatenate([v[BM:], pad], axis=0)

    # Input is host-side position-decimated into 4 phase streams (s = p % 4), rows (t, b).
    xb = x_ref[...].astype(CD)                                        # (4*S, C0), cast hoisted
    A, B4, C4, D4 = xb[0:S], xb[S:2 * S], xb[2 * S:3 * S], xb[3 * S:4 * S]

    # --- block 1: Conv1d(C0->C1, k3, p1) + BN + ReLU + MaxPool(2), emitted as even/odd streams
    wm, w0, wp = c1w_ref[0], c1w_ref[1], c1w_ref[2]
    b1 = c1b_ref[...]
    y4t0 = mm(prev_blk(D4), wm) + mm(A, w0) + mm(B4, wp)              # conv out @ positions 4t
    y4t1 = mm(A, wm) + mm(B4, w0) + mm(C4, wp)                        #                   4t+1
    y4t2 = mm(B4, wm) + mm(C4, w0) + mm(D4, wp)                       #                   4t+2
    y4t3 = mm(C4, wm) + mm(D4, w0) + mm(next_blk(A), wp)              #                   4t+3
    # relu(max(.,.) + b) == maxpool(relu(conv + b)): bias is per-channel, relu/+b monotone.
    E1 = jnp.maximum(jnp.maximum(y4t0, y4t1) + b1, 0.0).astype(CD)    # pooled, even positions
    O1 = jnp.maximum(jnp.maximum(y4t2, y4t3) + b1, 0.0).astype(CD)    # pooled, odd positions

    # --- block 2: Conv1d(C1->C2) + BN + ReLU + MaxPool(2) -> natural position order
    wm, w0, wp = c2w_ref[0], c2w_ref[1], c2w_ref[2]
    b2 = c2b_ref[...]
    z_even = mm(prev_blk(O1), wm) + mm(E1, w0) + mm(O1, wp)
    z_odd = mm(E1, wm) + mm(O1, w0) + mm(next_blk(E1), wp)
    a2 = jnp.maximum(jnp.maximum(z_even, z_odd) + b2, 0.0).astype(CD)  # (S, C2)

    # --- block 3: Conv1d(C2->C3) + BN + ReLU (no pool)
    wm, w0, wp = c3w_ref[0], c3w_ref[1], c3w_ref[2]
    b3 = c3b_ref[...]
    u = mm(prev_blk(a2), wm) + mm(a2, w0) + mm(next_blk(a2), wp) + b3
    a3 = jnp.maximum(u, 0.0).astype(CD)                                # (S, C3)

    # --- classifier: Flatten + Linear(1280,256) + ReLU + Dropout(identity) + Linear(256,nc)
    # TODO(synk): nn.Dropout() is identity at inference; train-mode RNG mask not modeled.
    acc = jnp.zeros((BM, f1w_ref.shape[2]), jnp.float32)
    for l in range(n_pos):                 # per-position FC1 partials (contiguous row blocks)
        acc = acc + mm(a3[l * BM:(l + 1) * BM, :], f1w_ref[l])
    h = jnp.maximum(acc + f1b_ref[...], 0.0).astype(CD)
    out_ref[...] = mm(h, f2w_ref[...]) + f2b_ref[...]                  # (BM, 128) lane-dense


def vgg_forward(x, packed, num_classes):
    B, C0, L0 = x.shape
    assert L0 % 4 == 0, "two MaxPool1d(2) stages require L divisible by 4"
    assert len(packed) == 10

    _, c0p, c1p = packed[0].shape
    assert c0p == C0
    c2p = packed[2].shape[2]
    c3p = packed[4].shape[2]
    Lf, _, n_hidden = packed[6].shape
    assert Lf == L0 // 4
    n_pad = packed[8].shape[1]            # classifier lane-padded width (128)

    # Batch tile: conv matmul M is (L0//4)*BM, so a modest BM already fills MXU rows; a cap
    # keeps lane-padded VMEM small.  Falls back to BM=B for small / indivisible batches.
    BM = B
    for cand in (64, 32, 16, 8):
        if B > cand and B % cand == 0:
            BM = cand
            break
    G = B // BM

    # Host-side radix-4 position decimation: rows ordered (batch_block, phase s=p%4, t=p//4,
    # batch_within_block) so every conv tap / pool stream is a contiguous row block in-kernel.
    xk = (x.reshape(G, BM, C0, L0 // 4, 4)
            .transpose(0, 4, 3, 1, 2)
            .reshape(G * L0 * BM, C0))

    def const_spec(a):
        nd = a.ndim
        return pl.BlockSpec(a.shape, lambda i: (0,) * nd)

    flops = 2 * B * (L0 * 3 * c0p * c1p
                     + (L0 // 2) * 3 * c1p * c2p
                     + (L0 // 4) * 3 * c2p * c3p
                     + (L0 // 4) * c3p * n_hidden
                     + n_hidden * n_pad)
    bytes_accessed = int(xk.size) * xk.dtype.itemsize \
        + sum(int(p.size) * p.dtype.itemsize for p in packed) \
        + B * n_pad * 4

    out = pl.pallas_call(
        _fused_vgg_kernel,
        out_shape=jax.ShapeDtypeStruct((B, n_pad), jnp.float32),
        grid=(G,),
        in_specs=[pl.BlockSpec((L0 * BM, C0), lambda i: (i, 0))]
                 + [const_spec(a) for a in packed],
        out_specs=pl.BlockSpec((BM, n_pad), lambda i: (i, 0)),
        compiler_params=pltpu.CompilerParams(
            # Only shard across TensorCores when each core gets several steps; otherwise
            # megacore would just duplicate the (constant-index) weight DMA.
            dimension_semantics=(("parallel",) if G >= 8 else ("arbitrary",)),
            vmem_limit_bytes=32 * 1024 * 1024),
        cost_estimate=pl.CostEstimate(flops=flops, transcendentals=0,
                                      bytes_accessed=bytes_accessed),
    )(xk, *packed)
    return out[:, :num_classes]


# --------------------------------------------------------------------------- #
# Pure-JAX reference (PyTorch semantics) for a correctness sanity check
# --------------------------------------------------------------------------- #
def _reference_forward(x, conv_params, pools, w1, b1, w2, b2):
    a = x
    for p, do_pool in zip(conv_params, pools):
        L = a.shape[2]
        xp = jnp.pad(a, ((0, 0), (0, 0), (1, 1)))
        stk = jnp.stack([xp[:, :, k:k + L] for k in range(3)], axis=-1)   # (B,Cin,L,K)
        z = jnp.einsum('bilk,oik->bol', stk, p["w"]) + p["b"][None, :, None]
        inv = 1.0 / jnp.sqrt(p["var"] + BN_EPS)
        z = (z - p["mean"][None, :, None]) * (inv * p["gamma"])[None, :, None] \
            + p["beta"][None, :, None]
        a = jnp.maximum(z, 0.0)
        if do_pool:
            a = jnp.maximum(a[:, :, 0::2], a[:, :, 1::2])
    flat = a.reshape(a.shape[0], -1)
    h = jnp.maximum(flat @ w1.T + b1, 0.0)
    return h @ w2.T + b2


# --------------------------------------------------------------------------- #
# Deterministic parameter init (mirrors VGG._initialize_weights)
# --------------------------------------------------------------------------- #
def kaiming_fan_out(key, shape, fan_out):
    std = math.sqrt(2.0 / fan_out)
    return std * jax.random.normal(key, shape, jnp.float32)


if __name__ == "__main__":
    key = jax.random.PRNGKey(0)
    keys = jax.random.split(key, 8)

    B, C_in, L = 2, 4, 64
    x = jax.random.normal(keys[0], (B, C_in, L), jnp.float32)

    # conv blocks (in_ch, out_ch); maxpool after blocks 0 and 1 -> flatten = 80*16 = 1280
    cfg = [(C_in, 16), (16, 32), (32, 80)]
    pools = (True, True, False)

    conv_params = []
    for i, (ci, co) in enumerate(cfg):
        conv_params.append(dict(
            w=kaiming_fan_out(keys[i + 1], (co, ci, 3), fan_out=co * 3),  # kaiming, fan_out
            b=jnp.zeros((co,), jnp.float32),        # conv bias zero-init
            gamma=jnp.ones((co,), jnp.float32),     # BN weight = 1
            beta=jnp.zeros((co,), jnp.float32),     # BN bias = 0
            mean=jnp.zeros((co,), jnp.float32),     # BN running_mean
            var=jnp.ones((co,), jnp.float32),       # BN running_var
        ))

    num_classes = 4
    w1 = kaiming_fan_out(keys[5], (256, 1280), fan_out=256)
    b1 = jnp.zeros((256,), jnp.float32)
    w2 = kaiming_fan_out(keys[6], (num_classes, 256), fan_out=num_classes)
    b2 = jnp.zeros((num_classes,), jnp.float32)

    packed = pack_params(conv_params, L, w1, b1, w2, b2)   # once, outside forward

    out = vgg_forward(x, packed, num_classes)
    jax.block_until_ready(out)
    assert out.shape == (B, num_classes) and out.dtype == jnp.float32

    # Sanity check against a pure-JAX f32 reference (bf16 matmul operands -> loose tol).
    ref = _reference_forward(x, conv_params, pools, w1, b1, w2, b2)
    rel_err = float(jnp.linalg.norm(out - ref) / (jnp.linalg.norm(ref) + 1e-6))
    assert rel_err < 0.1, f"relative error too large: {rel_err}"

    print("KERNEL_OK")
</pallas_src>

<mosaic_0001>
module attributes {stable_mosaic.version = 11 : i64} {
  func.func @_fused_vgg_kernel(%arg0: i32, %arg1: memref<128x4xf32, #tpu.memory_space<vmem>>, %arg2: memref<3x4x16xbf16, #tpu.memory_space<vmem>>, %arg3: memref<1x16xf32, #tpu.memory_space<vmem>>, %arg4: memref<3x16x32xbf16, #tpu.memory_space<vmem>>, %arg5: memref<1x32xf32, #tpu.memory_space<vmem>>, %arg6: memref<3x32x80xbf16, #tpu.memory_space<vmem>>, %arg7: memref<1x80xf32, #tpu.memory_space<vmem>>, %arg8: memref<16x80x256xbf16, #tpu.memory_space<vmem>>, %arg9: memref<1x256xf32, #tpu.memory_space<vmem>>, %arg10: memref<256x128xbf16, #tpu.memory_space<vmem>>, %arg11: memref<1x128xf32, #tpu.memory_space<vmem>>, %arg12: memref<2x128xf32, #tpu.memory_space<vmem>>) attributes {dimension_semantics = [#tpu.dimension_semantics<arbitrary>], iteration_bounds = array<i64: 1>, scalar_prefetch = 0 : i64, scratch_operands = 0 : i64, tpu.core_type = #tpu.core_type<tc>, window_params = [{transform_indices = @transform_0, window_bounds = array<i64: 128, 4>}, {pipeline_mode = #tpu.pipeline_mode<synchronous>, transform_indices = @transform_1, window_bounds = array<i64: 3, 4, 16>}, {pipeline_mode = #tpu.pipeline_mode<synchronous>, transform_indices = @transform_2, window_bounds = array<i64: 1, 16>}, {pipeline_mode = #tpu.pipeline_mode<synchronous>, transform_indices = @transform_3, window_bounds = array<i64: 3, 16, 32>}, {pipeline_mode = #tpu.pipeline_mode<synchronous>, transform_indices = @transform_4, window_bounds = array<i64: 1, 32>}, {pipeline_mode = #tpu.pipeline_mode<synchronous>, transform_indices = @transform_5, window_bounds = array<i64: 3, 32, 80>}, {pipeline_mode = #tpu.pipeline_mode<synchronous>, transform_indices = @transform_6, window_bounds = array<i64: 1, 80>}, {pipeline_mode = #tpu.pipeline_mode<synchronous>, transform_indices = @transform_7, window_bounds = array<i64: 16, 80, 256>}, {pipeline_mode = #tpu.pipeline_mode<synchronous>, transform_indices = @transform_8, window_bounds = array<i64: 1, 256>}, {pipeline_mode = #tpu.pipeline_mode<synchronous>, transform_indices = @transform_9, window_bounds = array<i64: 256, 128>}, {pipeline_mode = #tpu.pipeline_mode<synchronous>, transform_indices = @transform_10, window_bounds = array<i64: 1, 128>}, {transform_indices = @transform_11, window_bounds = array<i64: 2, 128>}]} {
    %c0 = arith.constant 0 : index
    %c0_0 = arith.constant 0 : index
    %0 = vector.load %arg1[%c0, %c0_0] : memref<128x4xf32, #tpu.memory_space<vmem>>, vector<128x4xf32>
    %1 = arith.truncf %0 : vector<128x4xf32> to vector<128x4xbf16>
    %2 = vector.extract_strided_slice %1 {offsets = [0, 0], sizes = [32, 4], strides = [1, 1]} : vector<128x4xbf16> to vector<32x4xbf16>
    %3 = vector.extract_strided_slice %1 {offsets = [32, 0], sizes = [32, 4], strides = [1, 1]} : vector<128x4xbf16> to vector<32x4xbf16>
    %4 = vector.extract_strided_slice %1 {offsets = [64, 0], sizes = [32, 4], strides = [1, 1]} : vector<128x4xbf16> to vector<32x4xbf16>
    %5 = vector.extract_strided_slice %1 {offsets = [96, 0], sizes = [32, 4], strides = [1, 1]} : vector<128x4xbf16> to vector<32x4xbf16>
    %c0_1 = arith.constant 0 : index
    %c0_2 = arith.constant 0 : index
    %c0_3 = arith.constant 0 : index
    %6 = vector.load %arg2[%c0_1, %c0_2, %c0_3] : memref<3x4x16xbf16, #tpu.memory_space<vmem>>, vector<1x4x16xbf16>
    %7 = vector.shape_cast %6 : vector<1x4x16xbf16> to vector<4x16xbf16>
    %c1 = arith.constant 1 : index
    %c0_4 = arith.constant 0 : index
    %c0_5 = arith.constant 0 : index
    %8 = vector.load %arg2[%c1, %c0_4, %c0_5] : memref<3x4x16xbf16, #tpu.memory_space<vmem>>, vector<1x4x16xbf16>
    %9 = vector.shape_cast %8 : vector<1x4x16xbf16> to vector<4x16xbf16>
    %c2 = arith.constant 2 : index
    %c0_6 = arith.constant 0 : index
    %c0_7 = arith.constant 0 : index
    %10 = vector.load %arg2[%c2, %c0_6, %c0_7] : memref<3x4x16xbf16, #tpu.memory_space<vmem>>, vector<1x4x16xbf16>
    %11 = vector.shape_cast %10 : vector<1x4x16xbf16> to vector<4x16xbf16>
    %c0_8 = arith.constant 0 : index
    %c0_9 = arith.constant 0 : index
    %12 = vector.load %arg3[%c0_8, %c0_9] : memref<1x16xf32, #tpu.memory_space<vmem>>, vector<1x16xf32>
    %cst = arith.constant 0.000000e+00 : bf16
    %13 = vector.broadcast %cst : bf16 to vector<2x4xbf16>
    %14 = vector.extract_strided_slice %5 {offsets = [0, 0], sizes = [30, 4], strides = [1, 1]} : vector<32x4xbf16> to vector<30x4xbf16>
    %15 = tpu.concatenate %13, %14 in 0 : vector<2x4xbf16>, vector<30x4xbf16> -> vector<32x4xbf16>
    %cst_10 = arith.constant dense<0.000000e+00> : vector<32x16xf32>
    %16 = tpu.matmul %15, %7, %cst_10 {dimension_numbers = #tpu.dot_dimension_numbers<[1], [0], [0], [1], [0, 0, 1, 1], [], []>} : vector<32x4xbf16>, vector<4x16xbf16>, vector<32x16xf32> -> vector<32x16xf32>
    %cst_11 = arith.constant dense<0.000000e+00> : vector<32x16xf32>
    %17 = tpu.matmul %2, %9, %cst_11 {dimension_numbers = #tpu.dot_dimension_numbers<[1], [0], [0], [1], [0, 0, 1, 1], [], []>} : vector<32x4xbf16>, vector<4x16xbf16>, vector<32x16xf32> -> vector<32x16xf32>
    %18 = arith.addf %16, %17 : vector<32x16xf32>
    %cst_12 = arith.constant dense<0.000000e+00> : vector<32x16xf32>
    %19 = tpu.matmul %3, %11, %cst_12 {dimension_numbers = #tpu.dot_dimension_numbers<[1], [0], [0], [1], [0, 0, 1, 1], [], []>} : vector<32x4xbf16>, vector<4x16xbf16>, vector<32x16xf32> -> vector<32x16xf32>
    %20 = arith.addf %18, %19 : vector<32x16xf32>
    %cst_13 = arith.constant dense<0.000000e+00> : vector<32x16xf32>
    %21 = tpu.matmul %2, %7, %cst_13 {dimension_numbers = #tpu.dot_dimension_numbers<[1], [0], [0], [1], [0, 0, 1, 1], [], []>} : vector<32x4xbf16>, vector<4x16xbf16>, vector<32x16xf32> -> vector<32x16xf32>
    %cst_14 = arith.constant dense<0.000000e+00> : vector<32x16xf32>
    %22 = tpu.matmul %3, %9, %cst_14 {dimension_numbers = #tpu.dot_dimension_numbers<[1], [0], [0], [1], [0, 0, 1, 1], [], []>} : vector<32x4xbf16>, vector<4x16xbf16>, vector<32x16xf32> -> vector<32x16xf32>
    %23 = arith.addf %21, %22 : vector<32x16xf32>
    %cst_15 = arith.constant dense<0.000000e+00> : vector<32x16xf32>
    %24 = tpu.matmul %4, %11, %cst_15 {dimension_numbers = #tpu.dot_dimension_numbers<[1], [0], [0], [1], [0, 0, 1, 1], [], []>} : vector<32x4xbf16>, vector<4x16xbf16>, vector<32x16xf32> -> vector<32x16xf32>
    %25 = arith.addf %23, %24 : vector<32x16xf32>
    %cst_16 = arith.constant dense<0.000000e+00> : vector<32x16xf32>
    %26 = tpu.matmul %3, %7, %cst_16 {dimension_numbers = #tpu.dot_dimension_numbers<[1], [0], [0], [1], [0, 0, 1, 1], [], []>} : vector<32x4xbf16>, vector<4x16xbf16>, vector<32x16xf32> -> vector<32x16xf32>
    %cst_17 = arith.constant dense<0.000000e+00> : vector<32x16xf32>
    %27 = tpu.matmul %4, %9, %cst_17 {dimension_numbers = #tpu.dot_dimension_numbers<[1], [0], [0], [1], [0, 0, 1, 1], [], []>} : vector<32x4xbf16>, vector<4x16xbf16>, vector<32x16xf32> -> vector<32x16xf32>
    %28 = arith.addf %26, %27 : vector<32x16xf32>
    %cst_18 = arith.constant dense<0.000000e+00> : vector<32x16xf32>
    %29 = tpu.matmul %5, %11, %cst_18 {dimension_numbers = #tpu.dot_dimension_numbers<[1], [0], [0], [1], [0, 0, 1, 1], [], []>} : vector<32x4xbf16>, vector<4x16xbf16>, vector<32x16xf32> -> vector<32x16xf32>
    %30 = arith.addf %28, %29 : vector<32x16xf32>
    %cst_19 = arith.constant dense<0.000000e+00> : vector<32x16xf32>
    %31 = tpu.matmul %4, %7, %cst_19 {dimension_numbers = #tpu.dot_dimension_numbers<[1], [0], [0], [1], [0, 0, 1, 1], [], []>} : vector<32x4xbf16>, vector<4x16xbf16>, vector<32x16xf32> -> vector<32x16xf32>
    %cst_20 = arith.constant dense<0.000000e+00> : vector<32x16xf32>
    %32 = tpu.matmul %5, %9, %cst_20 {dimension_numbers = #tpu.dot_dimension_numbers<[1], [0], [0], [1], [0, 0, 1, 1], [], []>} : vector<32x4xbf16>, vector<4x16xbf16>, vector<32x16xf32> -> vector<32x16xf32>
    %33 = arith.addf %31, %32 : vector<32x16xf32>
    %cst_21 = arith.constant 0.000000e+00 : bf16
    %34 = vector.broadcast %cst_21 : bf16 to vector<2x4xbf16>
    %35 = vector.extract_strided_slice %2 {offsets = [2, 0], sizes = [30, 4], strides = [1, 1]} : vector<32x4xbf16> to vector<30x4xbf16>
    %36 = tpu.concatenate %35, %34 in 0 : vector<30x4xbf16>, vector<2x4xbf16> -> vector<32x4xbf16>
    %cst_22 = arith.constant dense<0.000000e+00> : vector<32x16xf32>
    %37 = tpu.matmul %36, %11, %cst_22 {dimension_numbers = #tpu.dot_dimension_numbers<[1], [0], [0], [1], [0, 0, 1, 1], [], []>} : vector<32x4xbf16>, vector<4x16xbf16>, vector<32x16xf32> -> vector<32x16xf32>
    %38 = arith.addf %33, %37 : vector<32x16xf32>
    %39 = arith.maximumf %20, %25 : vector<32x16xf32>
    %40 = vector.broadcast %12 : vector<1x16xf32> to vector<32x16xf32>
    %41 = arith.addf %39, %40 : vector<32x16xf32>
    %cst_23 = arith.constant 0.000000e+00 : f32
    %42 = vector.broadcast %cst_23 : f32 to vector<32x16xf32>
    %43 = arith.maximumf %41, %42 : vector<32x16xf32>
    %44 = arith.truncf %43 : vector<32x16xf32> to vector<32x16xbf16>
    %45 = arith.maximumf %30, %38 : vector<32x16xf32>
    %46 = vector.broadcast %12 : vector<1x16xf32> to vector<32x16xf32>
    %47 = arith.addf %45, %46 : vector<32x16xf32>
    %cst_24 = arith.constant 0.000000e+00 : f32
    %48 = vector.broadcast %cst_24 : f32 to vector<32x16xf32>
    %49 = arith.maximumf %47, %48 : vector<32x16xf32>
    %50 = arith.truncf %49 : vector<32x16xf32> to vector<32x16xbf16>
    %c0_25 = arith.constant 0 : index
    %c0_26 = arith.constant 0 : index
    %c0_27 = arith.constant 0 : index
    %51 = vector.load %arg4[%c0_25, %c0_26, %c0_27] : memref<3x16x32xbf16, #tpu.memory_space<vmem>>, vector<1x16x32xbf16>
    %52 = vector.shape_cast %51 : vector<1x16x32xbf16> to vector<16x32xbf16>
    %c1_28 = arith.constant 1 : index
    %c0_29 = arith.constant 0 : index
    %c0_30 = arith.constant 0 : index
    %53 = vector.load %arg4[%c1_28, %c0_29, %c0_30] : memref<3x16x32xbf16, #tpu.memory_space<vmem>>, vector<1x16x32xbf16>
    %54 = vector.shape_cast %53 : vector<1x16x32xbf16> to vector<16x32xbf16>
    %c2_31 = arith.constant 2 : index
    %c0_32 = arith.constant 0 : index
    %c0_33 = arith.constant 0 : index
    %55 = vector.load %arg4[%c2_31, %c0_32, %c0_33] : memref<3x16x32xbf16, #tpu.memory_space<vmem>>, vector<1x16x32xbf16>
    %56 = vector.shape_cast %55 : vector<1x16x32xbf16> to vector<16x32xbf16>
    %c0_34 = arith.constant 0 : index
    %c0_35 = arith.constant 0 : index
    %57 = vector.load %arg5[%c0_34, %c0_35] : memref<1x32xf32, #tpu.memory_space<vmem>>, vector<1x32xf32>
    %cst_36 = arith.constant 0.000000e+00 : bf16
    %58 = vector.broadcast %cst_36 : bf16 to vector<2x16xbf16>
    %59 = vector.extract_strided_slice %50 {offsets = [0, 0], sizes = [30, 16], strides = [1, 1]} : vector<32x16xbf16> to vector<30x16xbf16>
    %60 = tpu.concatenate %58, %59 in 0 : vector<2x16xbf16>, vector<30x16xbf16> -> vector<32x16xbf16>
    %cst_37 = arith.constant dense<0.000000e+00> : vector<32x32xf32>
    %61 = tpu.matmul %60, %52, %cst_37 {dimension_numbers = #tpu.dot_dimension_numbers<[1], [0], [0], [1], [0, 0, 1, 1], [], []>} : vector<32x16xbf16>, vector<16x32xbf16>, vector<32x32xf32> -> vector<32x32xf32>
    %cst_38 = arith.constant dense<0.000000e+00> : vector<32x32xf32>
    %62 = tpu.matmul %44, %54, %cst_38 {dimension_numbers = #tpu.dot_dimension_numbers<[1], [0], [0], [1], [0, 0, 1, 1], [], []>} : vector<32x16xbf16>, vector<16x32xbf16>, vector<32x32xf32> -> vector<32x32xf32>
    %63 = arith.addf %61, %62 : vector<32x32xf32>
    %cst_39 = arith.constant dense<0.000000e+00> : vector<32x32xf32>
    %64 = tpu.matmul %50, %56, %cst_39 {dimension_numbers = #tpu.dot_dimension_numbers<[1], [0], [0], [1], [0, 0, 1, 1], [], []>} : vector<32x16xbf16>, vector<16x32xbf16>, vector<32x32xf32> -> vector<32x32xf32>
    %65 = arith.addf %63, %64 : vector<32x32xf32>
    %cst_40 = arith.constant dense<0.000000e+00> : vector<32x32xf32>
    %66 = tpu.matmul %44, %52, %cst_40 {dimension_numbers = #tpu.dot_dimension_numbers<[1], [0], [0], [1], [0, 0, 1, 1], [], []>} : vector<32x16xbf16>, vector<16x32xbf16>, vector<32x32xf32> -> vector<32x32xf32>
    %cst_41 = arith.constant dense<0.000000e+00> : vector<32x32xf32>
    %67 = tpu.matmul %50, %54, %cst_41 {dimension_numbers = #tpu.dot_dimension_numbers<[1], [0], [0], [1], [0, 0, 1, 1], [], []>} : vector<32x16xbf16>, vector<16x32xbf16>, vector<32x32xf32> -> vector<32x32xf32>
    %68 = arith.addf %66, %67 : vector<32x32xf32>
    %cst_42 = arith.constant 0.000000e+00 : bf16
    %69 = vector.broadcast %cst_42 : bf16 to vector<2x16xbf16>
    %70 = vector.extract_strided_slice %44 {offsets = [2, 0], sizes = [30, 16], strides = [1, 1]} : vector<32x16xbf16> to vector<30x16xbf16>
    %71 = tpu.concatenate %70, %69 in 0 : vector<30x16xbf16>, vector<2x16xbf16> -> vector<32x16xbf16>
    %cst_43 = arith.constant dense<0.000000e+00> : vector<32x32xf32>
    %72 = tpu.matmul %71, %56, %cst_43 {dimension_numbers = #tpu.dot_dimension_numbers<[1], [0], [0], [1], [0, 0, 1, 1], [], []>} : vector<32x16xbf16>, vector<16x32xbf16>, vector<32x32xf32> -> vector<32x32xf32>
    %73 = arith.addf %68, %72 : vector<32x32xf32>
    %74 = arith.maximumf %65, %73 : vector<32x32xf32>
    %75 = vector.broadcast %57 : vector<1x32xf32> to vector<32x32xf32>
    %76 = arith.addf %74, %75 : vector<32x32xf32>
    %cst_44 = arith.constant 0.000000e+00 : f32
    %77 = vector.broadcast %cst_44 : f32 to vector<32x32xf32>
    %78 = arith.maximumf %76, %77 : vector<32x32xf32>
    %79 = arith.truncf %78 : vector<32x32xf32> to vector<32x32xbf16>
    %c0_45 = arith.constant 0 : index
    %c0_46 = arith.constant 0 : index
    %c0_47 = arith.constant 0 : index
    %80 = vector.load %arg6[%c0_45, %c0_46, %c0_47] : memref<3x32x80xbf16, #tpu.memory_space<vmem>>, vector<1x32x80xbf16>
    %81 = vector.shape_cast %80 : vector<1x32x80xbf16> to vector<32x80xbf16>
    %c1_48 = arith.constant 1 : index
    %c0_49 = arith.constant 0 : index
    %c0_50 = arith.constant 0 : index
    %82 = vector.load %arg6[%c1_48, %c0_49, %c0_50] : memref<3x32x80xbf16, #tpu.memory_space<vmem>>, vector<1x32x80xbf16>
    %83 = vector.shape_cast %82 : vector<1x32x80xbf16> to vector<32x80xbf16>
    %c2_51 = arith.constant 2 : index
    %c0_52 = arith.constant 0 : index
    %c0_53 = arith.constant 0 : index
    %84 = vector.load %arg6[%c2_51, %c0_52, %c0_53] : memref<3x32x80xbf16, #tpu.memory_space<vmem>>, vector<1x32x80xbf16>
    %85 = vector.shape_cast %84 : vector<1x32x80xbf16> to vector<32x80xbf16>
    %c0_54 = arith.constant 0 : index
    %c0_55 = arith.constant 0 : index
    %86 = vector.load %arg7[%c0_54, %c0_55] : memref<1x80xf32, #tpu.memory_space<vmem>>, vector<1x80xf32>
    %cst_56 = arith.constant 0.000000e+00 : bf16
    %87 = vector.broadcast %cst_56 : bf16 to vector<2x32xbf16>
    %88 = vector.extract_strided_slice %79 {offsets = [0, 0], sizes = [30, 32], strides = [1, 1]} : vector<32x32xbf16> to vector<30x32xbf16>
    %89 = tpu.concatenate %87, %88 in 0 : vector<2x32xbf16>, vector<30x32xbf16> -> vector<32x32xbf16>
    %cst_57 = arith.constant dense<0.000000e+00> : vector<32x80xf32>
    %90 = tpu.matmul %89, %81, %cst_57 {dimension_numbers = #tpu.dot_dimension_numbers<[1], [0], [0], [1], [0, 0, 1, 1], [], []>} : vector<32x32xbf16>, vector<32x80xbf16>, vector<32x80xf32> -> vector<32x80xf32>
    %cst_58 = arith.constant dense<0.000000e+00> : vector<32x80xf32>
    %91 = tpu.matmul %79, %83, %cst_58 {dimension_numbers = #tpu.dot_dimension_numbers<[1], [0], [0], [1], [0, 0, 1, 1], [], []>} : vector<32x32xbf16>, vector<32x80xbf16>, vector<32x80xf32> -> vector<32x80xf32>
    %92 = arith.addf %90, %91 : vector<32x80xf32>
    %cst_59 = arith.constant 0.000000e+00 : bf16
    %93 = vector.broadcast %cst_59 : bf16 to vector<2x32xbf16>
    %94 = vector.extract_strided_slice %79 {offsets = [2, 0], sizes = [30, 32], strides = [1, 1]} : vector<32x32xbf16> to vector<30x32xbf16>
    %95 = tpu.concatenate %94, %93 in 0 : vector<30x32xbf16>, vector<2x32xbf16> -> vector<32x32xbf16>
    %cst_60 = arith.constant dense<0.000000e+00> : vector<32x80xf32>
    %96 = tpu.matmul %95, %85, %cst_60 {dimension_numbers = #tpu.dot_dimension_numbers<[1], [0], [0], [1], [0, 0, 1, 1], [], []>} : vector<32x32xbf16>, vector<32x80xbf16>, vector<32x80xf32> -> vector<32x80xf32>
    %97 = arith.addf %92, %96 : vector<32x80xf32>
    %98 = vector.broadcast %86 : vector<1x80xf32> to vector<32x80xf32>
    %99 = arith.addf %97, %98 : vector<32x80xf32>
    %cst_61 = arith.constant 0.000000e+00 : f32
    %100 = vector.broadcast %cst_61 : f32 to vector<32x80xf32>
    %101 = arith.maximumf %99, %100 : vector<32x80xf32>
    %102 = arith.truncf %101 : vector<32x80xf32> to vector<32x80xbf16>
    %cst_62 = arith.constant 0.000000e+00 : f32
    %103 = vector.broadcast %cst_62 : f32 to vector<2x256xf32>
    %104 = vector.extract_strided_slice %102 {offsets = [0, 0], sizes = [2, 80], strides = [1, 1]} : vector<32x80xbf16> to vector<2x80xbf16>
    %c0_63 = arith.constant 0 : index
    %c0_64 = arith.constant 0 : index
    %c0_65 = arith.constant 0 : index
    %105 = vector.load %arg8[%c0_63, %c0_64, %c0_65] : memref<16x80x256xbf16, #tpu.memory_space<vmem>>, vector<1x80x256xbf16>
    %106 = vector.shape_cast %105 : vector<1x80x256xbf16> to vector<80x256xbf16>
    %cst_66 = arith.constant dense<0.000000e+00> : vector<2x256xf32>
    %107 = tpu.matmul %104, %106, %cst_66 {dimension_numbers = #tpu.dot_dimension_numbers<[1], [0], [0], [1], [0, 0, 1, 1], [], []>} : vector<2x80xbf16>, vector<80x256xbf16>, vector<2x256xf32> -> vector<2x256xf32>
    %108 = arith.addf %103, %107 : vector<2x256xf32>
    %109 = vector.extract_strided_slice %102 {offsets = [2, 0], sizes = [2, 80], strides = [1, 1]} : vector<32x80xbf16> to vector<2x80xbf16>
    %c1_67 = arith.constant 1 : index
    %c0_68 = arith.constant 0 : index
    %c0_69 = arith.constant 0 : index
    %110 = vector.load %arg8[%c1_67, %c0_68, %c0_69] : memref<16x80x256xbf16, #tpu.memory_space<vmem>>, vector<1x80x256xbf16>
    %111 = vector.shape_cast %110 : vector<1x80x256xbf16> to vector<80x256xbf16>
    %cst_70 = arith.constant dense<0.000000e+00> : vector<2x256xf32>
    %112 = tpu.matmul %109, %111, %cst_70 {dimension_numbers = #tpu.dot_dimension_numbers<[1], [0], [0], [1], [0, 0, 1, 1], [], []>} : vector<2x80xbf16>, vector<80x256xbf16>, vector<2x256xf32> -> vector<2x256xf32>
    %113 = arith.addf %108, %112 : vector<2x256xf32>
    %114 = vector.extract_strided_slice %102 {offsets = [4, 0], sizes = [2, 80], strides = [1, 1]} : vector<32x80xbf16> to vector<2x80xbf16>
    %c2_71 = arith.constant 2 : index
    %c0_72 = arith.constant 0 : index
    %c0_73 = arith.constant 0 : index
    %115 = vector.load %arg8[%c2_71, %c0_72, %c0_73] : memref<16x80x256xbf16, #tpu.memory_space<vmem>>, vector<1x80x256xbf16>
    %116 = vector.shape_cast %115 : vector<1x80x256xbf16> to vector<80x256xbf16>
    %cst_74 = arith.constant dense<0.000000e+00> : vector<2x256xf32>
    %117 = tpu.matmul %114, %116, %cst_74 {dimension_numbers = #tpu.dot_dimension_numbers<[1], [0], [0], [1], [0, 0, 1, 1], [], []>} : vector<2x80xbf16>, vector<80x256xbf16>, vector<2x256xf32> -> vector<2x256xf32>
    %118 = arith.addf %113, %117 : vector<2x256xf32>
    %119 = vector.extract_strided_slice %102 {offsets = [6, 0], sizes = [2, 80], strides = [1, 1]} : vector<32x80xbf16> to vector<2x80xbf16>
    %c3 = arith.constant 3 : index
    %c0_75 = arith.constant 0 : index
    %c0_76 = arith.constant 0 : index
    %120 = vector.load %arg8[%c3, %c0_75, %c0_76] : memref<16x80x256xbf16, #tpu.memory_space<vmem>>, vector<1x80x256xbf16>
    %121 = vector.shape_cast %120 : vector<1x80x256xbf16> to vector<80x256xbf16>
    %cst_77 = arith.constant dense<0.000000e+00> : vector<2x256xf32>
    %122 = tpu.matmul %119, %121, %cst_77 {dimension_numbers = #tpu.dot_dimension_numbers<[1], [0], [0], [1], [0, 0, 1, 1], [], []>} : vector<2x80xbf16>, vector<80x256xbf16>, vector<2x256xf32> -> vector<2x256xf32>
    %123 = arith.addf %118, %122 : vector<2x256xf32>
    %124 = vector.extract_strided_slice %102 {offsets = [8, 0], sizes = [2, 80], strides = [1, 1]} : vector<32x80xbf16> to vector<2x80xbf16>
    %c4 = arith.constant 4 : index
    %c0_78 = arith.constant 0 : index
    %c0_79 = arith.constant 0 : index
    %125 = vector.load %arg8[%c4, %c0_78, %c0_79] : memref<16x80x256xbf16, #tpu.memory_space<vmem>>, vector<1x80x256xbf16>
    %126 = vector.shape_cast %125 : vector<1x80x256xbf16> to vector<80x256xbf16>
    %cst_80 = arith.constant dense<0.000000e+00> : vector<2x256xf32>
    %127 = tpu.matmul %124, %126, %cst_80 {dimension_numbers = #tpu.dot_dimension_numbers<[1], [0], [0], [1], [0, 0, 1, 1], [], []>} : vector<2x80xbf16>, vector<80x256xbf16>, vector<2x256xf32> -> vector<2x256xf32>
    %128 = arith.addf %123, %127 : vector<2x256xf32>
    %129 = vector.extract_strided_slice %102 {offsets = [10, 0], sizes = [2, 80], strides = [1, 1]} : vector<32x80xbf16> to vector<2x80xbf16>
    %c5 = arith.constant 5 : index
    %c0_81 = arith.constant 0 : index
    %c0_82 = arith.constant 0 : index
    %130 = vector.load %arg8[%c5, %c0_81, %c0_82] : memref<16x80x256xbf16, #tpu.memory_space<vmem>>, vector<1x80x256xbf16>
    %131 = vector.shape_cast %130 : vector<1x80x256xbf16> to vector<80x256xbf16>
    %cst_83 = arith.constant dense<0.000000e+00> : vector<2x256xf32>
    %132 = tpu.matmul %129, %131, %cst_83 {dimension_numbers = #tpu.dot_dimension_numbers<[1], [0], [0], [1], [0, 0, 1, 1], [], []>} : vector<2x80xbf16>, vector<80x256xbf16>, vector<2x256xf32> -> vector<2x256xf32>
    %133 = arith.addf %128, %132 : vector<2x256xf32>
    %134 = vector.extract_strided_slice %102 {offsets = [12, 0], sizes = [2, 80], strides = [1, 1]} : vector<32x80xbf16> to vector<2x80xbf16>
    %c6 = arith.constant 6 : index
    %c0_84 = arith.constant 0 : index
    %c0_85 = arith.constant 0 : index
    %135 = vector.load %arg8[%c6, %c0_84, %c0_85] : memref<16x80x256xbf16, #tpu.memory_space<vmem>>, vector<1x80x256xbf16>
    %136 = vector.shape_cast %135 : vector<1x80x256xbf16> to vector<80x256xbf16>
    %cst_86 = arith.constant dense<0.000000e+00> : vector<2x256xf32>
    %137 = tpu.matmul %134, %136, %cst_86 {dimension_numbers = #tpu.dot_dimension_numbers<[1], [0], [0], [1], [0, 0, 1, 1], [], []>} : vector<2x80xbf16>, vector<80x256xbf16>, vector<2x256xf32> -> vector<2x256xf32>
    %138 = arith.addf %133, %137 : vector<2x256xf32>
    %139 = vector.extract_strided_slice %102 {offsets = [14, 0], sizes = [2, 80], strides = [1, 1]} : vector<32x80xbf16> to vector<2x80xbf16>
    %c7 = arith.constant 7 : index
    %c0_87 = arith.constant 0 : index
    %c0_88 = arith.constant 0 : index
    %140 = vector.load %arg8[%c7, %c0_87, %c0_88] : memref<16x80x256xbf16, #tpu.memory_space<vmem>>, vector<1x80x256xbf16>
    %141 = vector.shape_cast %140 : vector<1x80x256xbf16> to vector<80x256xbf16>
    %cst_89 = arith.constant dense<0.000000e+00> : vector<2x256xf32>
    %142 = tpu.matmul %139, %141, %cst_89 {dimension_numbers = #tpu.dot_dimension_numbers<[1], [0], [0], [1], [0, 0, 1, 1], [], []>} : vector<2x80xbf16>, vector<80x256xbf16>, vector<2x256xf32> -> vector<2x256xf32>
    %143 = arith.addf %138, %142 : vector<2x256xf32>
    %144 = vector.extract_strided_slice %102 {offsets = [16, 0], sizes = [2, 80], strides = [1, 1]} : vector<32x80xbf16> to vector<2x80xbf16>
    %c8 = arith.constant 8 : index
    %c0_90 = arith.constant 0 : index
    %c0_91 = arith.constant 0 : index
    %145 = vector.load %arg8[%c8, %c0_90, %c0_91] : memref<16x80x256xbf16, #tpu.memory_space<vmem>>, vector<1x80x256xbf16>
    %146 = vector.shape_cast %145 : vector<1x80x256xbf16> to vector<80x256xbf16>
    %cst_92 = arith.constant dense<0.000000e+00> : vector<2x256xf32>
    %147 = tpu.matmul %144, %146, %cst_92 {dimension_numbers = #tpu.dot_dimension_numbers<[1], [0], [0], [1], [0, 0, 1, 1], [], []>} : vector<2x80xbf16>, vector<80x256xbf16>, vector<2x256xf32> -> vector<2x256xf32>
    %148 = arith.addf %143, %147 : vector<2x256xf32>
    %149 = vector.extract_strided_slice %102 {offsets = [18, 0], sizes = [2, 80], strides = [1, 1]} : vector<32x80xbf16> to vector<2x80xbf16>
    %c9 = arith.constant 9 : index
    %c0_93 = arith.constant 0 : index
    %c0_94 = arith.constant 0 : index
    %150 = vector.load %arg8[%c9, %c0_93, %c0_94] : memref<16x80x256xbf16, #tpu.memory_space<vmem>>, vector<1x80x256xbf16>
    %151 = vector.shape_cast %150 : vector<1x80x256xbf16> to vector<80x256xbf16>
    %cst_95 = arith.constant dense<0.000000e+00> : vector<2x256xf32>
    %152 = tpu.matmul %149, %151, %cst_95 {dimension_numbers = #tpu.dot_dimension_numbers<[1], [0], [0], [1], [0, 0, 1, 1], [], []>} : vector<2x80xbf16>, vector<80x256xbf16>, vector<2x256xf32> -> vector<2x256xf32>
    %153 = arith.addf %148, %152 : vector<2x256xf32>
    %154 = vector.extract_strided_slice %102 {offsets = [20, 0], sizes = [2, 80], strides = [1, 1]} : vector<32x80xbf16> to vector<2x80xbf16>
    %c10 = arith.constant 10 : index
    %c0_96 = arith.constant 0 : index
    %c0_97 = arith.constant 0 : index
    %155 = vector.load %arg8[%c10, %c0_96, %c0_97] : memref<16x80x256xbf16, #tpu.memory_space<vmem>>, vector<1x80x256xbf16>
    %156 = vector.shape_cast %155 : vector<1x80x256xbf16> to vector<80x256xbf16>
    %cst_98 = arith.constant dense<0.000000e+00> : vector<2x256xf32>
    %157 = tpu.matmul %154, %156, %cst_98 {dimension_numbers = #tpu.dot_dimension_numbers<[1], [0], [0], [1], [0, 0, 1, 1], [], []>} : vector<2x80xbf16>, vector<80x256xbf16>, vector<2x256xf32> -> vector<2x256xf32>
    %158 = arith.addf %153, %157 : vector<2x256xf32>
    %159 = vector.extract_strided_slice %102 {offsets = [22, 0], sizes = [2, 80], strides = [1, 1]} : vector<32x80xbf16> to vector<2x80xbf16>
    %c11 = arith.constant 11 : index
    %c0_99 = arith.constant 0 : index
    %c0_100 = arith.constant 0 : index
    %160 = vector.load %arg8[%c11, %c0_99, %c0_100] : memref<16x80x256xbf16, #tpu.memory_space<vmem>>, vector<1x80x256xbf16>
    %161 = vector.shape_cast %160 : vector<1x80x256xbf16> to vector<80x256xbf16>
    %cst_101 = arith.constant dense<0.000000e+00> : vector<2x256xf32>
    %162 = tpu.matmul %159, %161, %cst_101 {dimension_numbers = #tpu.dot_dimension_numbers<[1], [0], [0], [1], [0, 0, 1, 1], [], []>} : vector<2x80xbf16>, vector<80x256xbf16>, vector<2x256xf32> -> vector<2x256xf32>
    %163 = arith.addf %158, %162 : vector<2x256xf32>
    %164 = vector.extract_strided_slice %102 {offsets = [24, 0], sizes = [2, 80], strides = [1, 1]} : vector<32x80xbf16> to vector<2x80xbf16>
    %c12 = arith.constant 12 : index
    %c0_102 = arith.constant 0 : index
    %c0_103 = arith.constant 0 : index
    %165 = vector.load %arg8[%c12, %c0_102, %c0_103] : memref<16x80x256xbf16, #tpu.memory_space<vmem>>, vector<1x80x256xbf16>
    %166 = vector.shape_cast %165 : vector<1x80x256xbf16> to vector<80x256xbf16>
    %cst_104 = arith.constant dense<0.000000e+00> : vector<2x256xf32>
    %167 = tpu.matmul %164, %166, %cst_104 {dimension_numbers = #tpu.dot_dimension_numbers<[1], [0], [0], [1], [0, 0, 1, 1], [], []>} : vector<2x80xbf16>, vector<80x256xbf16>, vector<2x256xf32> -> vector<2x256xf32>
    %168 = arith.addf %163, %167 : vector<2x256xf32>
    %169 = vector.extract_strided_slice %102 {offsets = [26, 0], sizes = [2, 80], strides = [1, 1]} : vector<32x80xbf16> to vector<2x80xbf16>
    %c13 = arith.constant 13 : index
    %c0_105 = arith.constant 0 : index
    %c0_106 = arith.constant 0 : index
    %170 = vector.load %arg8[%c13, %c0_105, %c0_106] : memref<16x80x256xbf16, #tpu.memory_space<vmem>>, vector<1x80x256xbf16>
    %171 = vector.shape_cast %170 : vector<1x80x256xbf16> to vector<80x256xbf16>
    %cst_107 = arith.constant dense<0.000000e+00> : vector<2x256xf32>
    %172 = tpu.matmul %169, %171, %cst_107 {dimension_numbers = #tpu.dot_dimension_numbers<[1], [0], [0], [1], [0, 0, 1, 1], [], []>} : vector<2x80xbf16>, vector<80x256xbf16>, vector<2x256xf32> -> vector<2x256xf32>
    %173 = arith.addf %168, %172 : vector<2x256xf32>
    %174 = vector.extract_strided_slice %102 {offsets = [28, 0], sizes = [2, 80], strides = [1, 1]} : vector<32x80xbf16> to vector<2x80xbf16>
    %c14 = arith.constant 14 : index
    %c0_108 = arith.constant 0 : index
    %c0_109 = arith.constant 0 : index
    %175 = vector.load %arg8[%c14, %c0_108, %c0_109] : memref<16x80x256xbf16, #tpu.memory_space<vmem>>, vector<1x80x256xbf16>
    %176 = vector.shape_cast %175 : vector<1x80x256xbf16> to vector<80x256xbf16>
    %cst_110 = arith.constant dense<0.000000e+00> : vector<2x256xf32>
    %177 = tpu.matmul %174, %176, %cst_110 {dimension_numbers = #tpu.dot_dimension_numbers<[1], [0], [0], [1], [0, 0, 1, 1], [], []>} : vector<2x80xbf16>, vector<80x256xbf16>, vector<2x256xf32> -> vector<2x256xf32>
    %178 = arith.addf %173, %177 : vector<2x256xf32>
    %179 = vector.extract_strided_slice %102 {offsets = [30, 0], sizes = [2, 80], strides = [1, 1]} : vector<32x80xbf16> to vector<2x80xbf16>
    %c15 = arith.constant 15 : index
    %c0_111 = arith.constant 0 : index
    %c0_112 = arith.constant 0 : index
    %180 = vector.load %arg8[%c15, %c0_111, %c0_112] : memref<16x80x256xbf16, #tpu.memory_space<vmem>>, vector<1x80x256xbf16>
    %181 = vector.shape_cast %180 : vector<1x80x256xbf16> to vector<80x256xbf16>
    %cst_113 = arith.constant dense<0.000000e+00> : vector<2x256xf32>
    %182 = tpu.matmul %179, %181, %cst_113 {dimension_numbers = #tpu.dot_dimension_numbers<[1], [0], [0], [1], [0, 0, 1, 1], [], []>} : vector<2x80xbf16>, vector<80x256xbf16>, vector<2x256xf32> -> vector<2x256xf32>
    %183 = arith.addf %178, %182 : vector<2x256xf32>
    %c0_114 = arith.constant 0 : index
    %c0_115 = arith.constant 0 : index
    %184 = vector.load %arg9[%c0_114, %c0_115] : memref<1x256xf32, #tpu.memory_space<vmem>>, vector<1x256xf32>
    %185 = vector.broadcast %184 : vector<1x256xf32> to vector<2x256xf32>
    %186 = arith.addf %183, %185 : vector<2x256xf32>
    %cst_116 = arith.constant 0.000000e+00 : f32
    %187 = vector.broadcast %cst_116 : f32 to vector<2x256xf32>
    %188 = arith.maximumf %186, %187 : vector<2x256xf32>
    %189 = arith.truncf %188 : vector<2x256xf32> to vector<2x256xbf16>
    %c0_117 = arith.constant 0 : index
    %c0_118 = arith.constant 0 : index
    %190 = vector.load %arg10[%c0_117, %c0_118] : memref<256x128xbf16, #tpu.memory_space<vmem>>, vector<256x128xbf16>
    %cst_119 = arith.constant dense<0.000000e+00> : vector<2x128xf32>
    %191 = tpu.matmul %189, %190, %cst_119 {dimension_numbers = #tpu.dot_dimension_numbers<[1], [0], [0], [1], [0, 0, 1, 1], [], []>} : vector<2x256xbf16>, vector<256x128xbf16>, vector<2x128xf32> -> vector<2x128xf32>
    %c0_120 = arith.constant 0 : index
    %c0_121 = arith.constant 0 : index
    %192 = vector.load %arg11[%c0_120, %c0_121] : memref<1x128xf32, #tpu.memory_space<vmem>>, vector<1x128xf32>
    %193 = vector.broadcast %192 : vector<1x128xf32> to vector<2x128xf32>
    %194 = arith.addf %191, %193 : vector<2x128xf32>
    %c0_122 = arith.constant 0 : index
    %c0_123 = arith.constant 0 : index
    %195 = vector.load %arg12[%c0_122, %c0_123] : memref<2x128xf32, #tpu.memory_space<vmem>>, vector<2x128xf32>
    tpu.vector_store %arg12[%c0_122, %c0_123], %194 {strides = array<i32>} : memref<2x128xf32, #tpu.memory_space<vmem>>, vector<2x128xf32>,
    return
  }
  func.func @transform_0(%arg0: i32) -> (i32, i32) {
    %c0_i32 = arith.constant 0 : i32
    %c0_i32_0 = arith.constant 0 : i32
    return %arg0, %c0_i32 : i32, i32
  }
  func.func @transform_1(%arg0: i32) -> (i32, i32, i32) {
    %c0_i32 = arith.constant 0 : i32
    %c0_i32_0 = arith.constant 0 : i32
    %c0_i32_1 = arith.constant 0 : i32
    %c0_i32_2 = arith.constant 0 : i32
    return %c0_i32, %c0_i32_0, %c0_i32_1 : i32, i32, i32
  }
  func.func @transform_2(%arg0: i32) -> (i32, i32) {
    %c0_i32 = arith.constant 0 : i32
    %c0_i32_0 = arith.constant 0 : i32
    %c0_i32_1 = arith.constant 0 : i32
    return %c0_i32, %c0_i32_0 : i32, i32
  }
  func.func @transform_3(%arg0: i32) -> (i32, i32, i32) {
    %c0_i32 = arith.constant 0 : i32
    %c0_i32_0 = arith.constant 0 : i32
    %c0_i32_1 = arith.constant 0 : i32
    %c0_i32_2 = arith.constant 0 : i32
    return %c0_i32, %c0_i32_0, %c0_i32_1 : i32, i32, i32
  }
  func.func @transform_4(%arg0: i32) -> (i32, i32) {
    %c0_i32 = arith.constant 0 : i32
    %c0_i32_0 = arith.constant 0 : i32
    %c0_i32_1 = arith.constant 0 : i32
    return %c0_i32, %c0_i32_0 : i32, i32
  }
  func.func @transform_5(%arg0: i32) -> (i32, i32, i32) {
    %c0_i32 = arith.constant 0 : i32
    %c0_i32_0 = arith.constant 0 : i32
    %c0_i32_1 = arith.constant 0 : i32
    %c0_i32_2 = arith.constant 0 : i32
    return %c0_i32, %c0_i32_0, %c0_i32_1 : i32, i32, i32
  }
  func.func @transform_6(%arg0: i32) -> (i32, i32) {
    %c0_i32 = arith.constant 0 : i32
    %c0_i32_0 = arith.constant 0 : i32
    %c0_i32_1 = arith.constant 0 : i32
    return %c0_i32, %c0_i32_0 : i32, i32
  }
  func.func @transform_7(%arg0: i32) -> (i32, i32, i32) {
    %c0_i32 = arith.constant 0 : i32
    %c0_i32_0 = arith.constant 0 : i32
    %c0_i32_1 = arith.constant 0 : i32
    %c0_i32_2 = arith.constant 0 : i32
    return %c0_i32, %c0_i32_0, %c0_i32_1 : i32, i32, i32
  }
  func.func @transform_8(%arg0: i32) -> (i32, i32) {
    %c0_i32 = arith.constant 0 : i32
    %c0_i32_0 = arith.constant 0 : i32
    %c0_i32_1 = arith.constant 0 : i32
    return %c0_i32, %c0_i32_0 : i32, i32
  }
  func.func @transform_9(%arg0: i32) -> (i32, i32) {
    %c0_i32 = arith.constant 0 : i32
    %c0_i32_0 = arith.constant 0 : i32
    %c0_i32_1 = arith.constant 0 : i32
    return %c0_i32, %c0_i32_0 : i32, i32
  }
  func.func @transform_10(%arg0: i32) -> (i32, i32) {
    %c0_i32 = arith.constant 0 : i32
    %c0_i32_0 = arith.constant 0 : i32
    %c0_i32_1 = arith.constant 0 : i32
    return %c0_i32, %c0_i32_0 : i32, i32
  }
  func.func @transform_11(%arg0: i32) -> (i32, i32) {
    %c0_i32 = arith.constant 0 : i32
    %c0_i32_0 = arith.constant 0 : i32
    return %arg0, %c0_i32 : i32, i32
  }
}

</mosaic_0001>

<llo_original>
// kernel: tpu_custom_call.1
$region0: #{tpu_custom_call.1}
  #allocation0 [shape = 'u32[]', space=smem, size = 0x4, offset = 0x4, fixed_abs, tag = 'smem constant byte address 0x4 - core index']
  #allocation1 [shape = 'u32[72,128]{1,0:T(1,128)}', space=vmem, size = 0x9000, scoped, tag = 'internal scratch']
  %s0 = inlined_call_operand.vmem [shape: f32[128,4], index: 0, kind: input, shape index: {}]
  %s1 = inlined_call_operand.vmem [shape: bf16[3,4,16], index: 1, kind: input, shape index: {}]
  %s2 = inlined_call_operand.vmem [shape: f32[1,16], index: 2, kind: input, shape index: {}]
  %s3 = inlined_call_operand.hbm [shape: bf16[3,16,32], index: 3, kind: input, shape index: {}]
  %s4 = inlined_call_operand.vmem [shape: f32[1,32], index: 4, kind: input, shape index: {}]
  %s5 = inlined_call_operand.hbm [shape: bf16[3,32,80], index: 5, kind: input, shape index: {}]
  %s6 = inlined_call_operand.vmem [shape: f32[1,80], index: 6, kind: input, shape index: {}]
  %s7 = inlined_call_operand.hbm [shape: bf16[16,80,256], index: 7, kind: input, shape index: {}]
  %s8 = inlined_call_operand.vmem [shape: f32[1,256], index: 8, kind: input, shape index: {}]
  %s9 = inlined_call_operand.vmem [shape: bf16[256,128], index: 9, kind: input, shape index: {}]
  %s10 = inlined_call_operand.vmem [shape: f32[1,128], index: 10, kind: input, shape index: {}]
  %s11 = inlined_call_operand.hbm [shape: f32[2,128], index: 11, kind: output, shape index: {}]
  %s12 = sld [smem:[#allocation0]]
  $region66: #{tpu_custom_call.1} parent=0
    _
  %s14 = ssub.s32 1, %s12
  %s15 = scalar_select 0, %s14, %s12
  $region1: #{tpu_custom_call.1} parent=0
    #allocation2 [shape = 'u8[12288]{0}', space=vmem, size = 0x3000, scoped, tag = 'input window, operand 3, single buffered']
    #allocation3 [shape = 's32[1]{0}', space=sflag, size = 0x4, scoped, tag = 'scoped memory for tpu_custom_call.1']
    #allocation4 [shape = 's32[1]{0}', space=sflag, size = 0x4, scoped, tag = 'scoped memory for tpu_custom_call.1']
    #allocation5 [shape = 'u8[24576]{0}', space=vmem, size = 0x6000, scoped, tag = 'input window, operand 5, single buffered']
    #allocation6 [shape = 's32[1]{0}', space=sflag, size = 0x4, scoped, tag = 'scoped memory for tpu_custom_call.1']
    #allocation7 [shape = 'u8[655360]{0}', space=vmem, size = 0xa0000, scoped, tag = 'input window, operand 7, single buffered']
    #allocation8 [shape = 'u8[1024]{0}', space=vmem, size = 0x400, scoped, tag = 'output window, operand 0, single buffered']
    %16 = vsyncpa [#allocation3], 0
    %17 = vsyncpa [#allocation6], 0
    %18 = vsyncpa [#allocation4], 0
    // Predicated region
    $region2: #{tpu_custom_call.1} parent=1 // pred_check
      _
    $region3: #{tpu_custom_call.1} parent=1 // pred_check_branch
      %20 = sbr.rel (0) target = $region5
    $region4: #{tpu_custom_call.1} parent=1 // pred_region
      _
    $region5: #{tpu_custom_call.1} parent=1 // pred_fallthru
      _
    // Predicated region
    $region6: #{tpu_custom_call.1} parent=1 // pred_check
      _
    $region7: #{tpu_custom_call.1} parent=1 // pred_check_branch
      %22 = sbr.rel (0) target = $region9
    $region8: #{tpu_custom_call.1} parent=1 // pred_region
      _
    $region9: #{tpu_custom_call.1} parent=1 // pred_fallthru
      _
    // Predicated region
    $region10: #{tpu_custom_call.1} parent=1 // pred_check
      _
    $region11: #{tpu_custom_call.1} parent=1 // pred_check_branch
      %24 = sbr.rel (0) target = $region13
    $region12: #{tpu_custom_call.1} parent=1 // pred_region
      _
    $region13: #{tpu_custom_call.1} parent=1 // pred_fallthru
      _
    // Predicated region
    $region14: #{tpu_custom_call.1} parent=1 // pred_check
      _
    $region15: #{tpu_custom_call.1} parent=1 // pred_check_branch
      %26 = sbr.rel (0) target = $region17
    $region16: #{tpu_custom_call.1} parent=1 // pred_region
      %28 = vsyncadd [#allocation3], 0
      %s29 = sshll.u32 %s3, 4
      %s30 = int_to_ptr.hbm [resolvable:$true] %s29
      %s31 = sshll.u32 [#allocation2], 4
      %s32 = int_to_ptr.vmem [resolvable:$true] %s31
      %37 = dma.hbm_to_vmem [thread:$0]  %s30, 384, %s32, [#allocation3], 64, 64, 4
    $region17: #{tpu_custom_call.1} parent=1 // pred_fallthru
      _
    // Predicated region
    $region18: #{tpu_custom_call.1} parent=1 // pred_check
      _
    $region19: #{tpu_custom_call.1} parent=1 // pred_check_branch
      %39 = sbr.rel (0) target = $region21
    $region20: #{tpu_custom_call.1} parent=1 // pred_region
      _
    $region21: #{tpu_custom_call.1} parent=1 // pred_fallthru
      _
    // Predicated region
    $region22: #{tpu_custom_call.1} parent=1 // pred_check
      _
    $region23: #{tpu_custom_call.1} parent=1 // pred_check_branch
      %41 = sbr.rel (0) target = $region25
    $region24: #{tpu_custom_call.1} parent=1 // pred_region
      %43 = vsyncadd [#allocation6], 0
      %s44 = sshll.u32 %s5, 4
      %s45 = int_to_ptr.hbm [resolvable:$true] %s44
      %s46 = sshll.u32 [#allocation5], 4
      %s47 = int_to_ptr.vmem [resolvable:$true] %s46
      %52 = dma.hbm_to_vmem [thread:$0]  %s45, 768, %s47, [#allocation6], 64, 64, 4
    $region25: #{tpu_custom_call.1} parent=1 // pred_fallthru
      _
    // Predicated region
    $region26: #{tpu_custom_call.1} parent=1 // pred_check
      _
    $region27: #{tpu_custom_call.1} parent=1 // pred_check_branch
      %54 = sbr.rel (0) target = $region29
    $region28: #{tpu_custom_call.1} parent=1 // pred_region
      _
    $region29: #{tpu_custom_call.1} parent=1 // pred_fallthru
      _
    // Predicated region
    $region30: #{tpu_custom_call.1} parent=1 // pred_check
      _
    $region31: #{tpu_custom_call.1} parent=1 // pred_check_branch
      %56 = sbr.rel (0) target = $region33
    $region32: #{tpu_custom_call.1} parent=1 // pred_region
      %58 = vsyncadd [#allocation6], 0
      %s59 = sshll.u32 %s7, 4
      %s60 = int_to_ptr.hbm [resolvable:$true] %s59
      %s61 = sshll.u32 [#allocation7], 4
      %s62 = int_to_ptr.vmem [resolvable:$true] %s61
      %67 = dma.hbm_to_vmem [thread:$0]  %s60, 20480, %s62, [#allocation6], 128, 128, 8
    $region33: #{tpu_custom_call.1} parent=1 // pred_fallthru
      _
    // Predicated region
    $region34: #{tpu_custom_call.1} parent=1 // pred_check
      _
    $region35: #{tpu_custom_call.1} parent=1 // pred_check_branch
      %69 = sbr.rel (0) target = $region37
    $region36: #{tpu_custom_call.1} parent=1 // pred_region
      _
    $region37: #{tpu_custom_call.1} parent=1 // pred_fallthru
      _
    // Predicated region
    $region38: #{tpu_custom_call.1} parent=1 // pred_check
      _
    $region39: #{tpu_custom_call.1} parent=1 // pred_check_branch
      %71 = sbr.rel (0) target = $region41
    $region40: #{tpu_custom_call.1} parent=1 // pred_region
      _
    $region41: #{tpu_custom_call.1} parent=1 // pred_fallthru
      _
    // Predicated region
    $region42: #{tpu_custom_call.1} parent=1 // pred_check
      _
    $region43: #{tpu_custom_call.1} parent=1 // pred_check_branch
      %73 = sbr.rel (0) target = $region45
    $region44: #{tpu_custom_call.1} parent=1 // pred_region
      _
    $region45: #{tpu_custom_call.1} parent=1 // pred_fallthru
      _
    // Predicated region
    $region46: #{tpu_custom_call.1} parent=1 // pred_check
      _
    $region47: #{tpu_custom_call.1} parent=1 // pred_check_branch
      %75 = sbr.rel (0) target = $region49
    $region48: #{tpu_custom_call.1} parent=1 // pred_region
      %77 = dma.done [#allocation3], 384
    $region49: #{tpu_custom_call.1} parent=1 // pred_fallthru
      _
    // Predicated region
    $region50: #{tpu_custom_call.1} parent=1 // pred_check
      _
    $region51: #{tpu_custom_call.1} parent=1 // pred_check_branch
      %79 = sbr.rel (0) target = $region53
    $region52: #{tpu_custom_call.1} parent=1 // pred_region
      %81 = dma.done [#allocation6], 768
    $region53: #{tpu_custom_call.1} parent=1 // pred_fallthru
      _
    // Predicated region
    $region54: #{tpu_custom_call.1} parent=1 // pred_check
      _
    $region55: #{tpu_custom_call.1} parent=1 // pred_check_branch
      %83 = sbr.rel (0) target = $region57
    $region56: #{tpu_custom_call.1} parent=1 // pred_region
      %85 = dma.done [#allocation6], 20480
    $region57: #{tpu_custom_call.1} parent=1 // pred_fallthru
      _
    %v87 = vld [vmem:[%s0] sm:$0xff]
    %v88 = vld [vmem:[%s0 + $0x8] sm:$0xff]
    %v89 = vld [vmem:[%s0 + $0x10] sm:$0xff]
    %v90 = vld [vmem:[%s0 + $0x18] sm:$0xff]
    %v91 = vld [vmem:[%s0 + $0x20] sm:$0xff]
    %v92 = vld [vmem:[%s0 + $0x28] sm:$0xff]
    %v93 = vld [vmem:[%s0 + $0x30] sm:$0xff]
    %v94 = vld [vmem:[%s0 + $0x38] sm:$0xff]
    %v95 = vld [vmem:[%s0 + $0x40] sm:$0xff]
    %v96 = vld [vmem:[%s0 + $0x48] sm:$0xff]
    %v97 = vld [vmem:[%s0 + $0x50] sm:$0xff]
    %v98 = vld [vmem:[%s0 + $0x58] sm:$0xff]
    %v99 = vld [vmem:[%s0 + $0x60] sm:$0xff]
    %v100 = vld [vmem:[%s0 + $0x68] sm:$0xff]
    %v101 = vld [vmem:[%s0 + $0x70] sm:$0xff]
    %v102 = vld [vmem:[%s0 + $0x78] sm:$0xff]
    %v103 = vpack.c.bf16 %v87, %v87
    %v104 = vpack.c.bf16 %v88, %v88
    %v105 = vpack.c.bf16 %v89, %v89
    %v106 = vpack.c.bf16 %v90, %v90
    %v107 = vpack.c.bf16 %v91, %v91
    %v108 = vpack.c.bf16 %v92, %v92
    %v109 = vpack.c.bf16 %v93, %v93
    %v110 = vpack.c.bf16 %v94, %v94
    %v111 = vpack.c.bf16 %v95, %v95
    %v112 = vpack.c.bf16 %v96, %v96
    %v113 = vpack.c.bf16 %v97, %v97
    %v114 = vpack.c.bf16 %v98, %v98
    %v115 = vpack.c.bf16 %v99, %v99
    %v116 = vpack.c.bf16 %v100, %v100
    %v117 = vpack.c.bf16 %v101, %v101
    %v118 = vpack.c.bf16 %v102, %v102
    %v119 = vld [vmem:[%s1] sm:$0x3]
    %s120 = scalar_lea.vmem %s1, 2
    %v121 = vld [vmem:[%s120] sm:$0x3]
    %s122 = scalar_lea.vmem %s1, 4
    %v123 = vld [vmem:[%s122] sm:$0x3]
    %v124 = vld [vmem:[%s2] sm:$0x1]
    %v129 = vunpack.c.l.b16 %v115
    %v130 = vunpack.c.l.b16 %v116
    %v131 = vunpack.c.l.b16 %v117
    %v132 = vunpack.c.l.b16 %v118
    %v133 = vpack.c.b16 %v130, %v129
    %v134 = vpack.c.b16 %v132, %v131
    %vm135 = vcmask 1040384
    %v136 = vrot.slane %v133, 7
    %v137 = vrot.slane %v134, 7
    %v138 = vsel %vm135, %v136, %v137
    %vm139 = vcmask 1040384
    %v142 = vsel %vm139, 0, %v136
    %v147 = vunpack.c.l.b16 %v103
    %v148 = vunpack.c.l.b16 %v104
    %v149 = vunpack.c.l.b16 %v105
    %v150 = vunpack.c.l.b16 %v106
    %v151 = vpack.c.b16 %v148, %v147
    %v152 = vpack.c.b16 %v150, %v149
    %vm153 = vcmask 31744
    %v155 = vsel %vm153, %v151, 0
    %v158 = vsel %vm153, %v152, 0
    %vm160 = vcmask 1041408
    %v162 = vsel %vm160, %v121, 0
    %164 = vmatpush.bf16.msra.mxu0 0
    %165 = vmatpush.bf16.msra.mxu0 0
    %166 = vmatpush.bf16.msra.mxu0 0
    %167 = vmatpush.bf16.msra.mxu0 0
    %168 = vmatpush.bf16.msra.mxu0 0
    %169 = vmatpush.bf16.msra.mxu0 0
    %170 = vmatpush.bf16.msra.mxu0 0
    %171 = vmatpush.bf16.msra.mxu0 %v162
    %172 = vmatmul.bf16.gmra.mxu0 %v155
    %v173 = vpop.f32.mrf.mxu0
    %v174 = vadd.f32 0.0, %v173
    %v175 = vpop.f32.mrf.mxu0
    %v176 = vadd.f32 0.0, %v175
    %177 = vmatmul.bf16.gmra.mxu0 %v158
    %v178 = vpop.f32.mrf.mxu0
    %v179 = vadd.f32 0.0, %v178
    %v180 = vpop.f32.mrf.mxu0
    %v181 = vadd.f32 0.0, %v180
    %182 = vdwg.mxu0
    %v183 = vsel %vm153, %v142, 0
    %v186 = vsel %vm153, %v138, 0
    %v189 = vsel %vm160, %v119, 0
    %191 = vmatpush.bf16.msra.mxu0 0
    %192 = vmatpush.bf16.msra.mxu0 0
    %193 = vmatpush.bf16.msra.mxu0 0
    %194 = vmatpush.bf16.msra.mxu0 0
    %195 = vmatpush.bf16.msra.mxu0 0
    %196 = vmatpush.bf16.msra.mxu0 0
    %197 = vmatpush.bf16.msra.mxu0 0
    %198 = vmatpush.bf16.msra.mxu0 %v189
    %199 = vmatmul.bf16.gmra.mxu0 %v183
    %v200 = vpop.f32.mrf.mxu0
    %v201 = vadd.f32 %v174, %v200
    %v202 = vpop.f32.mrf.mxu0
    %v203 = vadd.f32 %v176, %v202
    %204 = vmatmul.bf16.gmra.mxu0 %v186
    %v205 = vpop.f32.mrf.mxu0
    %v206 = vadd.f32 %v179, %v205
    %v207 = vpop.f32.mrf.mxu0
    %v208 = vadd.f32 %v181, %v207
    %209 = vdwg.mxu0
    %v214 = vunpack.c.l.b16 %v107
    %v215 = vunpack.c.l.b16 %v108
    %v216 = vunpack.c.l.b16 %v109
    %v217 = vunpack.c.l.b16 %v110
    %v218 = vpack.c.b16 %v215, %v214
    %v219 = vpack.c.b16 %v217, %v216
    %v221 = vsel %vm153, %v218, 0
    %v224 = vsel %vm153, %v219, 0
    %v227 = vsel %vm160, %v123, 0
    %229 = vmatpush.bf16.msra.mxu0 0
    %230 = vmatpush.bf16.msra.mxu0 0
    %231 = vmatpush.bf16.msra.mxu0 0
    %232 = vmatpush.bf16.msra.mxu0 0
    %233 = vmatpush.bf16.msra.mxu0 0
    %234 = vmatpush.bf16.msra.mxu0 0
    %235 = vmatpush.bf16.msra.mxu0 0
    %236 = vmatpush.bf16.msra.mxu0 %v227
    %237 = vmatmul.bf16.gmra.mxu0 %v221
    %v238 = vpop.f32.mrf.mxu0
    %v239 = vadd.f32 0.0, %v238
    %v240 = vpop.f32.mrf.mxu0
    %v241 = vadd.f32 0.0, %v240
    %242 = vmatmul.bf16.gmra.mxu0 %v224
    %v243 = vpop.f32.mrf.mxu0
    %v244 = vadd.f32 0.0, %v243
    %v245 = vpop.f32.mrf.mxu0
    %v246 = vadd.f32 0.0, %v245
    %247 = vdwg.mxu0
    %v248 = vadd.f32 %v201, %v239
    %v249 = vadd.f32 %v203, %v241
    %v250 = vadd.f32 %v206, %v244
    %v251 = vadd.f32 %v208, %v246
    %252 = vmatpush.bf16.msra.mxu0 0
    %253 = vmatpush.bf16.msra.mxu0 0
    %254 = vmatpush.bf16.msra.mxu0 0
    %255 = vmatpush.bf16.msra.mxu0 0
    %256 = vmatpush.bf16.msra.mxu0 0
    %257 = vmatpush.bf16.msra.mxu0 0
    %258 = vmatpush.bf16.msra.mxu0 0
    %259 = vmatpush.bf16.msra.mxu0 %v162
    %260 = vmatmul.bf16.gmra.mxu0 %v221
    %v261 = vpop.f32.mrf.mxu0
    %v262 = vadd.f32 0.0, %v261
    %v263 = vpop.f32.mrf.mxu0
    %v264 = vadd.f32 0.0, %v263
    %265 = vmatmul.bf16.gmra.mxu0 %v224
    %v266 = vpop.f32.mrf.mxu0
    %v267 = vadd.f32 0.0, %v266
    %v268 = vpop.f32.mrf.mxu0
    %v269 = vadd.f32 0.0, %v268
    %270 = vdwg.mxu0
    %271 = vmatpush.bf16.msra.mxu0 0
    %272 = vmatpush.bf16.msra.mxu0 0
    %273 = vmatpush.bf16.msra.mxu0 0
    %274 = vmatpush.bf16.msra.mxu0 0
    %275 = vmatpush.bf16.msra.mxu0 0
    %276 = vmatpush.bf16.msra.mxu0 0
    %277 = vmatpush.bf16.msra.mxu0 0
    %278 = vmatpush.bf16.msra.mxu0 %v189
    %279 = vmatmul.bf16.gmra.mxu0 %v155
    %v280 = vpop.f32.mrf.mxu0
    %v281 = vadd.f32 %v262, %v280
    %v282 = vpop.f32.mrf.mxu0
    %v283 = vadd.f32 %v264, %v282
    %284 = vmatmul.bf16.gmra.mxu0 %v158
    %v285 = vpop.f32.mrf.mxu0
    %v286 = vadd.f32 %v267, %v285
    %v287 = vpop.f32.mrf.mxu0
    %v288 = vadd.f32 %v269, %v287
    %289 = vdwg.mxu0
    %v294 = vunpack.c.l.b16 %v111
    %v295 = vunpack.c.l.b16 %v112
    %v296 = vunpack.c.l.b16 %v113
    %v297 = vunpack.c.l.b16 %v114
    %v298 = vpack.c.b16 %v295, %v294
    %v299 = vpack.c.b16 %v297, %v296
    %v301 = vsel %vm153, %v298, 0
    %v304 = vsel %vm153, %v299, 0
    %306 = vmatpush.bf16.msra.mxu0 0
    %307 = vmatpush.bf16.msra.mxu0 0
    %308 = vmatpush.bf16.msra.mxu0 0
    %309 = vmatpush.bf16.msra.mxu0 0
    %310 = vmatpush.bf16.msra.mxu0 0
    %311 = vmatpush.bf16.msra.mxu0 0
    %312 = vmatpush.bf16.msra.mxu0 0
    %313 = vmatpush.bf16.msra.mxu0 %v227
    %314 = vmatmul.bf16.gmra.mxu0 %v301
    %v315 = vpop.f32.mrf.mxu0
    %v316 = vadd.f32 0.0, %v315
    %v317 = vpop.f32.mrf.mxu0
    %v318 = vadd.f32 0.0, %v317
    %319 = vmatmul.bf16.gmra.mxu0 %v304
    %v320 = vpop.f32.mrf.mxu0
    %v321 = vadd.f32 0.0, %v320
    %v322 = vpop.f32.mrf.mxu0
    %v323 = vadd.f32 0.0, %v322
    %324 = vdwg.mxu0
    %v325 = vadd.f32 %v281, %v316
    %v326 = vadd.f32 %v283, %v318
    %v327 = vadd.f32 %v286, %v321
    %v328 = vadd.f32 %v288, %v323
    %329 = vmatpush.bf16.msra.mxu0 0
    %330 = vmatpush.bf16.msra.mxu0 0
    %331 = vmatpush.bf16.msra.mxu0 0
    %332 = vmatpush.bf16.msra.mxu0 0
    %333 = vmatpush.bf16.msra.mxu0 0
    %334 = vmatpush.bf16.msra.mxu0 0
    %335 = vmatpush.bf16.msra.mxu0 0
    %336 = vmatpush.bf16.msra.mxu0 %v162
    %337 = vmatmul.bf16.gmra.mxu0 %v301
    %v338 = vpop.f32.mrf.mxu0
    %v339 = vadd.f32 0.0, %v338
    %v340 = vpop.f32.mrf.mxu0
    %v341 = vadd.f32 0.0, %v340
    %342 = vmatmul.bf16.gmra.mxu0 %v304
    %v343 = vpop.f32.mrf.mxu0
    %v344 = vadd.f32 0.0, %v343
    %v345 = vpop.f32.mrf.mxu0
    %v346 = vadd.f32 0.0, %v345
    %347 = vdwg.mxu0
    %348 = vmatpush.bf16.msra.mxu0 0
    %349 = vmatpush.bf16.msra.mxu0 0
    %350 = vmatpush.bf16.msra.mxu0 0
    %351 = vmatpush.bf16.msra.mxu0 0
    %352 = vmatpush.bf16.msra.mxu0 0
    %353 = vmatpush.bf16.msra.mxu0 0
    %354 = vmatpush.bf16.msra.mxu0 0
    %355 = vmatpush.bf16.msra.mxu0 %v189
    %356 = vmatmul.bf16.gmra.mxu0 %v221
    %v357 = vpop.f32.mrf.mxu0
    %v358 = vadd.f32 %v339, %v357
    %v359 = vpop.f32.mrf.mxu0
    %v360 = vadd.f32 %v341, %v359
    %361 = vmatmul.bf16.gmra.mxu0 %v224
    %v362 = vpop.f32.mrf.mxu0
    %v363 = vadd.f32 %v344, %v362
    %v364 = vpop.f32.mrf.mxu0
    %v365 = vadd.f32 %v346, %v364
    %366 = vdwg.mxu0
    %v368 = vsel %vm153, %v133, 0
    %v371 = vsel %vm153, %v134, 0
    %373 = vmatpush.bf16.msra.mxu0 0
    %374 = vmatpush.bf16.msra.mxu0 0
    %375 = vmatpush.bf16.msra.mxu0 0
    %376 = vmatpush.bf16.msra.mxu0 0
    %377 = vmatpush.bf16.msra.mxu0 0
    %378 = vmatpush.bf16.msra.mxu0 0
    %379 = vmatpush.bf16.msra.mxu0 0
    %380 = vmatpush.bf16.msra.mxu0 %v227
    %381 = vmatmul.bf16.gmra.mxu0 %v368
    %v382 = vpop.f32.mrf.mxu0
    %v383 = vadd.f32 0.0, %v382
    %v384 = vpop.f32.mrf.mxu0
    %v385 = vadd.f32 0.0, %v384
    %386 = vmatmul.bf16.gmra.mxu0 %v371
    %v387 = vpop.f32.mrf.mxu0
    %v388 = vadd.f32 0.0, %v387
    %v389 = vpop.f32.mrf.mxu0
    %v390 = vadd.f32 0.0, %v389
    %391 = vdwg.mxu0
    %v392 = vadd.f32 %v358, %v383
    %v393 = vadd.f32 %v360, %v385
    %v394 = vadd.f32 %v363, %v388
    %v395 = vadd.f32 %v365, %v390
    %396 = vmatpush.bf16.msra.mxu0 0
    %397 = vmatpush.bf16.msra.mxu0 0
    %398 = vmatpush.bf16.msra.mxu0 0
    %399 = vmatpush.bf16.msra.mxu0 0
    %400 = vmatpush.bf16.msra.mxu0 0
    %401 = vmatpush.bf16.msra.mxu0 0
    %402 = vmatpush.bf16.msra.mxu0 0
    %403 = vmatpush.bf16.msra.mxu0 %v162
    %404 = vmatmul.bf16.gmra.mxu0 %v368
    %v405 = vpop.f32.mrf.mxu0
    %v406 = vadd.f32 0.0, %v405
    %v407 = vpop.f32.mrf.mxu0
    %v408 = vadd.f32 0.0, %v407
    %409 = vmatmul.bf16.gmra.mxu0 %v371
    %v410 = vpop.f32.mrf.mxu0
    %v411 = vadd.f32 0.0, %v410
    %v412 = vpop.f32.mrf.mxu0
    %v413 = vadd.f32 0.0, %v412
    %414 = vdwg.mxu0
    %415 = vmatpush.bf16.msra.mxu0 0
    %416 = vmatpush.bf16.msra.mxu0 0
    %417 = vmatpush.bf16.msra.mxu0 0
    %418 = vmatpush.bf16.msra.mxu0 0
    %419 = vmatpush.bf16.msra.mxu0 0
    %420 = vmatpush.bf16.msra.mxu0 0
    %421 = vmatpush.bf16.msra.mxu0 0
    %422 = vmatpush.bf16.msra.mxu0 %v189
    %423 = vmatmul.bf16.gmra.mxu0 %v301
    %v424 = vpop.f32.mrf.mxu0
    %v425 = vadd.f32 %v406, %v424
    %v426 = vpop.f32.mrf.mxu0
    %v427 = vadd.f32 %v408, %v426
    %428 = vmatmul.bf16.gmra.mxu0 %v304
    %v429 = vpop.f32.mrf.mxu0
    %v430 = vadd.f32 %v411, %v429
    %v431 = vpop.f32.mrf.mxu0
    %v432 = vadd.f32 %v413, %v431
    %433 = vdwg.mxu0
    %vm434 = vcmask 1046528
    %v435 = vrot.slane %v151, 1
    %v436 = vrot.slane %v152, 1
    %v437 = vsel %vm434, %v435, %v436
    %vm438 = vcmask 1046528
    %v440 = vsel %vm438, %v436, 0
    %v442 = vsel %vm153, %v437, 0
    %v444 = vsel %vm153, %v440, 0
    %446 = vmatpush.bf16.msra.mxu0 0
    %447 = vmatpush.bf16.msra.mxu0 0
    %448 = vmatpush.bf16.msra.mxu0 0
    %449 = vmatpush.bf16.msra.mxu0 0
    %450 = vmatpush.bf16.msra.mxu0 0
    %451 = vmatpush.bf16.msra.mxu0 0
    %452 = vmatpush.bf16.msra.mxu0 0
    %453 = vmatpush.bf16.msra.mxu0 %v227
    %454 = vmatmul.bf16.gmra.mxu0 %v442
    %v455 = vpop.f32.mrf.mxu0
    %v456 = vadd.f32 0.0, %v455
    %v457 = vpop.f32.mrf.mxu0
    %v458 = vadd.f32 0.0, %v457
    %459 = vmatmul.bf16.gmra.mxu0 %v444
    %v460 = vpop.f32.mrf.mxu0
    %v461 = vadd.f32 0.0, %v460
    %v462 = vpop.f32.mrf.mxu0
    %v463 = vadd.f32 0.0, %v462
    %464 = vdwg.mxu0
    %v465 = vadd.f32 %v425, %v456
    %v466 = vadd.f32 %v427, %v458
    %v467 = vadd.f32 %v430, %v461
    %v468 = vadd.f32 %v432, %v463
    %v469 = vmax.f32 %v248, %v325
    %v470 = vmax.f32 %v249, %v326
    %v471 = vmax.f32 %v250, %v327
    %v472 = vmax.f32 %v251, %v328
    %v474 = vperm.slane %v124, 0
    %v476 = vadd.f32 %v469, %v474
    %v477 = vadd.f32 %v470, %v474
    %v478 = vadd.f32 %v471, %v474
    %v479 = vadd.f32 %v472, %v474
    %v480 = vmax.f32 %v476, 0.0
    %v481 = vmax.f32 %v477, 0.0
    %v482 = vmax.f32 %v478, 0.0
    %v483 = vmax.f32 %v479, 0.0
    %v484 = vpack.c.bf16 %v480, %v480
    %v485 = vpack.c.bf16 %v481, %v481
    %v486 = vpack.c.bf16 %v482, %v482
    %v487 = vpack.c.bf16 %v483, %v483
    %v488 = vmax.f32 %v392, %v465
    %v489 = vmax.f32 %v393, %v466
    %v490 = vmax.f32 %v394, %v467
    %v491 = vmax.f32 %v395, %v468
    %v492 = vadd.f32 %v488, %v474
    %v493 = vadd.f32 %v489, %v474
    %v494 = vadd.f32 %v490, %v474
    %v495 = vadd.f32 %v491, %v474
    %v496 = vmax.f32 %v492, 0.0
    %v497 = vmax.f32 %v493, 0.0
    %v498 = vmax.f32 %v494, 0.0
    %v499 = vmax.f32 %v495, 0.0
    %v500 = vpack.c.bf16 %v496, %v496
    %v501 = vpack.c.bf16 %v497, %v497
    %v502 = vpack.c.bf16 %v498, %v498
    %v503 = vpack.c.bf16 %v499, %v499
    %v504 = vld [vmem:[#allocation2] sm:$0xf]
    %v505 = vld [vmem:[#allocation2 + $0x4] sm:$0xf]
    %s506 = scalar_lea.vmem [#allocation2], 8
    %v507 = vld [vmem:[%s506] sm:$0xf]
    %v508 = vld [vmem:[%s506 + $0x4] sm:$0xf]
    %s509 = scalar_lea.vmem [#allocation2], 16
    %v510 = vld [vmem:[%s509] sm:$0xf]
    %v511 = vld [vmem:[%s509 + $0x4] sm:$0xf]
    %v512 = vld [vmem:[%s4] sm:$0x1]
    %v517 = vunpack.c.l.b16 %v500
    %v518 = vunpack.c.l.b16 %v501
    %v519 = vunpack.c.l.b16 %v502
    %v520 = vunpack.c.l.b16 %v503
    %v521 = vpack.c.b16 %v518, %v517
    %v522 = vpack.c.b16 %v520, %v519
    %v523 = vrot.slane %v521, 7
    %v524 = vrot.slane %v522, 7
    %v525 = vsel %vm135, %v523, %v524
    %v527 = vsel %vm139, 0, %v523
    %v532 = vunpack.c.l.b16 %v484
    %v533 = vunpack.c.l.b16 %v485
    %v534 = vunpack.c.l.b16 %v486
    %v535 = vunpack.c.l.b16 %v487
    %v536 = vpack.c.b16 %v533, %v532
    %v537 = vpack.c.b16 %v535, %v534
    %v540 = vunpack.c.l.b16 %v507
    %v541 = vunpack.c.l.b16 %v508
    %v542 = vpack.c.b16 %v541, %v540
    %vm544 = vcmask 130048
    %v546 = vsel %vm544, %v536, 0
    %v549 = vsel %vm544, %v537, 0
    %551 = vmatpush.bf16.msra.mxu0 0
    %552 = vmatpush.bf16.msra.mxu0 0
    %553 = vmatpush.bf16.msra.mxu0 0
    %554 = vmatpush.bf16.msra.mxu0 0
    %555 = vmatpush.bf16.msra.mxu0 0
    %556 = vmatpush.bf16.msra.mxu0 0
    %557 = vmatpush.bf16.msra.mxu0 0
    %558 = vmatpush.bf16.msra.mxu0 %v542
    %559 = vmatmul.bf16.gmra.mxu0 %v546
    %v560 = vpop.f32.mrf.mxu0
    %v561 = vadd.f32 0.0, %v560
    %v562 = vpop.f32.mrf.mxu0
    %v563 = vadd.f32 0.0, %v562
    %564 = vmatmul.bf16.gmra.mxu0 %v549
    %v565 = vpop.f32.mrf.mxu0
    %v566 = vadd.f32 0.0, %v565
    %v567 = vpop.f32.mrf.mxu0
    %v568 = vadd.f32 0.0, %v567
    %569 = vdwg.mxu0
    %v572 = vunpack.c.l.b16 %v504
    %v573 = vunpack.c.l.b16 %v505
    %v574 = vpack.c.b16 %v573, %v572
    %v576 = vsel %vm544, %v527, 0
    %v579 = vsel %vm544, %v525, 0
    %581 = vmatpush.bf16.msra.mxu0 0
    %582 = vmatpush.bf16.msra.mxu0 0
    %583 = vmatpush.bf16.msra.mxu0 0
    %584 = vmatpush.bf16.msra.mxu0 0
    %585 = vmatpush.bf16.msra.mxu0 0
    %586 = vmatpush.bf16.msra.mxu0 0
    %587 = vmatpush.bf16.msra.mxu0 0
    %588 = vmatpush.bf16.msra.mxu0 %v574
    %589 = vmatmul.bf16.gmra.mxu0 %v576
    %v590 = vpop.f32.mrf.mxu0
    %v591 = vadd.f32 %v561, %v590
    %v592 = vpop.f32.mrf.mxu0
    %v593 = vadd.f32 %v563, %v592
    %594 = vmatmul.bf16.gmra.mxu0 %v579
    %v595 = vpop.f32.mrf.mxu0
    %v596 = vadd.f32 %v566, %v595
    %v597 = vpop.f32.mrf.mxu0
    %v598 = vadd.f32 %v568, %v597
    %599 = vdwg.mxu0
    %v602 = vunpack.c.l.b16 %v510
    %v603 = vunpack.c.l.b16 %v511
    %v604 = vpack.c.b16 %v603, %v602
    %v607 = vsel %vm544, %v521, 0
    %v610 = vsel %vm544, %v522, 0
    %612 = vmatpush.bf16.msra.mxu0 0
    %613 = vmatpush.bf16.msra.mxu0 0
    %614 = vmatpush.bf16.msra.mxu0 0
    %615 = vmatpush.bf16.msra.mxu0 0
    %616 = vmatpush.bf16.msra.mxu0 0
    %617 = vmatpush.bf16.msra.mxu0 0
    %618 = vmatpush.bf16.msra.mxu0 0
    %619 = vmatpush.bf16.msra.mxu0 %v604
    %620 = vmatmul.bf16.gmra.mxu0 %v607
    %v621 = vpop.f32.mrf.mxu0
    %v622 = vadd.f32 0.0, %v621
    %v623 = vpop.f32.mrf.mxu0
    %v624 = vadd.f32 0.0, %v623
    %625 = vmatmul.bf16.gmra.mxu0 %v610
    %v626 = vpop.f32.mrf.mxu0
    %v627 = vadd.f32 0.0, %v626
    %v628 = vpop.f32.mrf.mxu0
    %v629 = vadd.f32 0.0, %v628
    %630 = vdwg.mxu0
    %v631 = vadd.f32 %v591, %v622
    %v632 = vadd.f32 %v593, %v624
    %v633 = vadd.f32 %v596, %v627
    %v634 = vadd.f32 %v598, %v629
    %635 = vmatpush.bf16.msra.mxu0 0
    %636 = vmatpush.bf16.msra.mxu0 0
    %637 = vmatpush.bf16.msra.mxu0 0
    %638 = vmatpush.bf16.msra.mxu0 0
    %639 = vmatpush.bf16.msra.mxu0 0
    %640 = vmatpush.bf16.msra.mxu0 0
    %641 = vmatpush.bf16.msra.mxu0 0
    %642 = vmatpush.bf16.msra.mxu0 %v542
    %643 = vmatmul.bf16.gmra.mxu0 %v607
    %v644 = vpop.f32.mrf.mxu0
    %v645 = vadd.f32 0.0, %v644
    %v646 = vpop.f32.mrf.mxu0
    %v647 = vadd.f32 0.0, %v646
    %648 = vmatmul.bf16.gmra.mxu0 %v610
    %v649 = vpop.f32.mrf.mxu0
    %v650 = vadd.f32 0.0, %v649
    %v651 = vpop.f32.mrf.mxu0
    %v652 = vadd.f32 0.0, %v651
    %653 = vdwg.mxu0
    %654 = vmatpush.bf16.msra.mxu0 0
    %655 = vmatpush.bf16.msra.mxu0 0
    %656 = vmatpush.bf16.msra.mxu0 0
    %657 = vmatpush.bf16.msra.mxu0 0
    %658 = vmatpush.bf16.msra.mxu0 0
    %659 = vmatpush.bf16.msra.mxu0 0
    %660 = vmatpush.bf16.msra.mxu0 0
    %661 = vmatpush.bf16.msra.mxu0 %v574
    %662 = vmatmul.bf16.gmra.mxu0 %v546
    %v663 = vpop.f32.mrf.mxu0
    %v664 = vadd.f32 %v645, %v663
    %v665 = vpop.f32.mrf.mxu0
    %v666 = vadd.f32 %v647, %v665
    %667 = vmatmul.bf16.gmra.mxu0 %v549
    %v668 = vpop.f32.mrf.mxu0
    %v669 = vadd.f32 %v650, %v668
    %v670 = vpop.f32.mrf.mxu0
    %v671 = vadd.f32 %v652, %v670
    %672 = vdwg.mxu0
    %v673 = vrot.slane %v536, 1
    %v674 = vrot.slane %v537, 1
    %v675 = vsel %vm434, %v673, %v674
    %v677 = vsel %vm438, %v674, 0
    %v679 = vsel %vm544, %v675, 0
    %v681 = vsel %vm544, %v677, 0
    %683 = vmatpush.bf16.msra.mxu0 0
    %684 = vmatpush.bf16.msra.mxu0 0
    %685 = vmatpush.bf16.msra.mxu0 0
    %686 = vmatpush.bf16.msra.mxu0 0
    %687 = vmatpush.bf16.msra.mxu0 0
    %688 = vmatpush.bf16.msra.mxu0 0
    %689 = vmatpush.bf16.msra.mxu0 0
    %690 = vmatpush.bf16.msra.mxu0 %v604
    %691 = vmatmul.bf16.gmra.mxu0 %v679
    %v692 = vpop.f32.mrf.mxu0
    %v693 = vadd.f32 0.0, %v692
    %v694 = vpop.f32.mrf.mxu0
    %v695 = vadd.f32 0.0, %v694
    %696 = vmatmul.bf16.gmra.mxu0 %v681
    %v697 = vpop.f32.mrf.mxu0
    %v698 = vadd.f32 0.0, %v697
    %v699 = vpop.f32.mrf.mxu0
    %v700 = vadd.f32 0.0, %v699
    %701 = vdwg.mxu0
    %v702 = vadd.f32 %v664, %v693
    %v703 = vadd.f32 %v666, %v695
    %v704 = vadd.f32 %v669, %v698
    %v705 = vadd.f32 %v671, %v700
    %v706 = vmax.f32 %v631, %v702
    %v707 = vmax.f32 %v632, %v703
    %v708 = vmax.f32 %v633, %v704
    %v709 = vmax.f32 %v634, %v705
    %v711 = vperm.slane %v512, 0
    %v713 = vadd.f32 %v706, %v711
    %v714 = vadd.f32 %v707, %v711
    %v715 = vadd.f32 %v708, %v711
    %v716 = vadd.f32 %v709, %v711
    %v717 = vmax.f32 %v713, 0.0
    %v718 = vmax.f32 %v714, 0.0
    %v719 = vmax.f32 %v715, 0.0
    %v720 = vmax.f32 %v716, 0.0
    %v721 = vpack.c.bf16 %v717, %v717
    %v722 = vpack.c.bf16 %v718, %v718
    %v723 = vpack.c.bf16 %v719, %v719
    %v724 = vpack.c.bf16 %v720, %v720
    %v725 = vld [vmem:[#allocation5] sm:$0xf]
    %v726 = vld [vmem:[#allocation5 + $0x4] sm:$0xf]
    %v727 = vld [vmem:[#allocation5 + $0x8] sm:$0xf]
    %v728 = vld [vmem:[#allocation5 + $0xc] sm:$0xf]
    %s729 = scalar_lea.vmem [#allocation5], 16
    %v730 = vld [vmem:[%s729] sm:$0xf]
    %v731 = vld [vmem:[%s729 + $0x4] sm:$0xf]
    %v732 = vld [vmem:[%s729 + $0x8] sm:$0xf]
    %v733 = vld [vmem:[%s729 + $0xc] sm:$0xf]
    %s734 = scalar_lea.vmem [#allocation5], 32
    %v735 = vld [vmem:[%s734] sm:$0xf]
    %v736 = vld [vmem:[%s734 + $0x4] sm:$0xf]
    %v737 = vld [vmem:[%s734 + $0x8] sm:$0xf]
    %v738 = vld [vmem:[%s734 + $0xc] sm:$0xf]
    %v739 = vld [vmem:[%s6] sm:$0x1]
    %v744 = vunpack.c.l.b16 %v721
    %v745 = vunpack.c.l.b16 %v722
    %v746 = vunpack.c.l.b16 %v723
    %v747 = vunpack.c.l.b16 %v724
    %v748 = vpack.c.b16 %v745, %v744
    %v749 = vpack.c.b16 %v747, %v746
    %v750 = vrot.slane %v748, 7
    %v751 = vrot.slane %v749, 7
    %v752 = vsel %vm135, %v750, %v751
    %v754 = vsel %vm139, 0, %v750
    %v759 = vunpack.c.l.b16 %v730
    %v760 = vunpack.c.l.b16 %v731
    %v761 = vunpack.c.l.b16 %v732
    %v762 = vunpack.c.l.b16 %v733
    %v763 = vpack.c.b16 %v760, %v759
    %v764 = vpack.c.b16 %v762, %v761
    %vm767 = vcmask 261120
    %v769 = vsel %vm767, %v748, 0
    %v772 = vsel %vm767, %v749, 0
    %774 = vmatpush.bf16.msra.mxu0 0
    %775 = vmatpush.bf16.msra.mxu0 0
    %776 = vmatpush.bf16.msra.mxu0 0
    %777 = vmatpush.bf16.msra.mxu0 0
    %778 = vmatpush.bf16.msra.mxu0 0
    %779 = vmatpush.bf16.msra.mxu0 0
    %780 = vmatpush.bf16.msra.mxu0 %v764
    %781 = vmatpush.bf16.msra.mxu0 %v763
    %782 = vmatmul.bf16.gmra.mxu0 %v769
    %v783 = vpop.f32.mrf.mxu0
    %v784 = vadd.f32 0.0, %v783
    %v785 = vpop.f32.mrf.mxu0
    %v786 = vadd.f32 0.0, %v785
    %787 = vmatmul.bf16.gmra.mxu0 %v772
    %v788 = vpop.f32.mrf.mxu0
    %v789 = vadd.f32 0.0, %v788
    %v790 = vpop.f32.mrf.mxu0
    %v791 = vadd.f32 0.0, %v790
    %792 = vdwg.mxu0
    %v797 = vunpack.c.l.b16 %v725
    %v798 = vunpack.c.l.b16 %v726
    %v799 = vunpack.c.l.b16 %v727
    %v800 = vunpack.c.l.b16 %v728
    %v801 = vpack.c.b16 %v798, %v797
    %v802 = vpack.c.b16 %v800, %v799
    %v805 = vsel %vm767, %v754, 0
    %v808 = vsel %vm767, %v752, 0
    %810 = vmatpush.bf16.msra.mxu0 0
    %811 = vmatpush.bf16.msra.mxu0 0
    %812 = vmatpush.bf16.msra.mxu0 0
    %813 = vmatpush.bf16.msra.mxu0 0
    %814 = vmatpush.bf16.msra.mxu0 0
    %815 = vmatpush.bf16.msra.mxu0 0
    %816 = vmatpush.bf16.msra.mxu0 %v802
    %817 = vmatpush.bf16.msra.mxu0 %v801
    %818 = vmatmul.bf16.gmra.mxu0 %v805
    %v819 = vpop.f32.mrf.mxu0
    %v820 = vadd.f32 %v784, %v819
    %v821 = vpop.f32.mrf.mxu0
    %v822 = vadd.f32 %v786, %v821
    %823 = vmatmul.bf16.gmra.mxu0 %v808
    %v824 = vpop.f32.mrf.mxu0
    %v825 = vadd.f32 %v789, %v824
    %v826 = vpop.f32.mrf.mxu0
    %v827 = vadd.f32 %v791, %v826
    %828 = vdwg.mxu0
    %v829 = vrot.slane %v748, 1
    %v830 = vrot.slane %v749, 1
    %v831 = vsel %vm434, %v829, %v830
    %v833 = vsel %vm438, %v830, 0
    %v838 = vunpack.c.l.b16 %v735
    %v839 = vunpack.c.l.b16 %v736
    %v840 = vunpack.c.l.b16 %v737
    %v841 = vunpack.c.l.b16 %v738
    %v842 = vpack.c.b16 %v839, %v838
    %v843 = vpack.c.b16 %v841, %v840
    %v847 = vsel %vm767, %v831, 0
    %v849 = vsel %vm767, %v833, 0
    %851 = vmatpush.bf16.msra.mxu0 0
    %852 = vmatpush.bf16.msra.mxu0 0
    %853 = vmatpush.bf16.msra.mxu0 0
    %854 = vmatpush.bf16.msra.mxu0 0
    %855 = vmatpush.bf16.msra.mxu0 0
    %856 = vmatpush.bf16.msra.mxu0 0
    %857 = vmatpush.bf16.msra.mxu0 %v843
    %858 = vmatpush.bf16.msra.mxu0 %v842
    %859 = vmatmul.bf16.gmra.mxu0 %v847
    %v860 = vpop.f32.mrf.mxu0
    %v861 = vadd.f32 0.0, %v860
    %v862 = vpop.f32.mrf.mxu0
    %v863 = vadd.f32 0.0, %v862
    %864 = vmatmul.bf16.gmra.mxu0 %v849
    %v865 = vpop.f32.mrf.mxu0
    %v866 = vadd.f32 0.0, %v865
    %v867 = vpop.f32.mrf.mxu0
    %v868 = vadd.f32 0.0, %v867
    %869 = vdwg.mxu0
    %v870 = vadd.f32 %v820, %v861
    %v871 = vadd.f32 %v822, %v863
    %v872 = vadd.f32 %v825, %v866
    %v873 = vadd.f32 %v827, %v868
    %v875 = vperm.slane %v739, 0
    %v877 = vadd.f32 %v870, %v875
    %v878 = vadd.f32 %v871, %v875
    %v879 = vadd.f32 %v872, %v875
    %v880 = vadd.f32 %v873, %v875
    %v881 = vmax.f32 %v877, 0.0
    %v882 = vmax.f32 %v878, 0.0
    %v883 = vmax.f32 %v879, 0.0
    %v884 = vmax.f32 %v880, 0.0
    %v885 = vpack.c.bf16 %v881, %v881
    %v886 = vpack.c.bf16 %v882, %v882
    %v887 = vpack.c.bf16 %v883, %v883
    %v888 = vpack.c.bf16 %v884, %v884
    %v889 = vld [vmem:[#allocation7] sm:$0xff]
    %v890 = vld [vmem:[#allocation7 + $0x8] sm:$0xff]
    %v891 = vld [vmem:[#allocation7 + $0x10] sm:$0xff]
    %v892 = vld [vmem:[#allocation7 + $0x18] sm:$0xff]
    %v893 = vld [vmem:[#allocation7 + $0x20] sm:$0xff]
    %v894 = vld [vmem:[#allocation7 + $0x28] sm:$0xff]
    %v895 = vld [vmem:[#allocation7 + $0x30] sm:$0xff]
    %v896 = vld [vmem:[#allocation7 + $0x38] sm:$0xff]
    %v897 = vld [vmem:[#allocation7 + $0x40] sm:$0xff]
    %v898 = vld [vmem:[#allocation7 + $0x48] sm:$0xff]
    %s899 = scalar_lea.vmem [#allocation7], 80
    %v900 = vld [vmem:[%s899] sm:$0xff]
    %v901 = vld [vmem:[%s899 + $0x8] sm:$0xff]
    %v902 = vld [vmem:[%s899 + $0x10] sm:$0xff]
    %v903 = vld [vmem:[%s899 + $0x18] sm:$0xff]
    %v904 = vld [vmem:[%s899 + $0x20] sm:$0xff]
    %v905 = vld [vmem:[%s899 + $0x28] sm:$0xff]
    %v906 = vld [vmem:[%s899 + $0x30] sm:$0xff]
    %v907 = vld [vmem:[%s899 + $0x38] sm:$0xff]
    %v908 = vld [vmem:[%s899 + $0x40] sm:$0xff]
    %v909 = vld [vmem:[%s899 + $0x48] sm:$0xff]
    %v911 = vunpack.c.l.b16 %v885
    %v912 = vpack.c.b16 %v911, %v911
    %v913 = vrot.slane %v912, 1
    %v924 = vunpack.c.l.b16 %v900
    %v925 = vunpack.c.h.b16 %v900
    %v926 = vunpack.c.l.b16 %v901
    %v927 = vunpack.c.h.b16 %v901
    %v928 = vunpack.c.l.b16 %v902
    %v929 = vunpack.c.h.b16 %v902
    %v930 = vunpack.c.l.b16 %v903
    %v931 = vunpack.c.h.b16 %v903
    %v932 = vunpack.c.l.b16 %v904
    %v933 = vunpack.c.h.b16 %v904
    %v934 = vunpack.c.l.b16 %v905
    %v935 = vunpack.c.h.b16 %v905
    %v936 = vunpack.c.l.b16 %v906
    %v937 = vunpack.c.h.b16 %v906
    %v938 = vunpack.c.l.b16 %v907
    %v939 = vunpack.c.h.b16 %v907
    %v940 = vunpack.c.l.b16 %v908
    %v941 = vunpack.c.h.b16 %v908
    %v942 = vunpack.c.l.b16 %v909
    %v943 = vunpack.c.h.b16 %v909
    %v944 = vpack.c.b16 %v926, %v924
    %v945 = vpack.c.b16 %v927, %v925
    %v946 = vpack.c.b16 %v930, %v928
    %v947 = vpack.c.b16 %v931, %v929
    %v948 = vpack.c.b16 %v934, %v932
    %v949 = vpack.c.b16 %v935, %v933
    %v950 = vpack.c.b16 %v938, %v936
    %v951 = vpack.c.b16 %v939, %v937
    %v952 = vpack.c.b16 %v942, %v940
    %v953 = vpack.c.b16 %v943, %v941
    %vm964 = vcmask 654336
    %v966 = vsel %vm964, %v913, 0
    %968 = vmatpush.bf16.msra.mxu0 0
    %969 = vmatpush.bf16.msra.mxu0 0
    %970 = vmatpush.bf16.msra.mxu0 0
    %971 = vmatpush.bf16.msra.mxu0 %v952
    %972 = vmatpush.bf16.msra.mxu0 %v950
    %973 = vmatpush.bf16.msra.mxu0 %v948
    %974 = vmatpush.bf16.msra.mxu0 %v946
    %975 = vmatpush.bf16.msra.mxu0 %v944
    %976 = vmatmul.bf16.gmra.mxu0 %v966
    %v977 = vpop.f32.mrf.mxu0
    %v978 = vadd.f32 0.0, %v977
    %v979 = vpop.f32.mrf.mxu0
    %980 = vdwg.mxu0
    %981 = vmatpush.bf16.msra.mxu0 0
    %982 = vmatpush.bf16.msra.mxu0 0
    %983 = vmatpush.bf16.msra.mxu0 0
    %984 = vmatpush.bf16.msra.mxu0 %v953
    %985 = vmatpush.bf16.msra.mxu0 %v951
    %986 = vmatpush.bf16.msra.mxu0 %v949
    %987 = vmatpush.bf16.msra.mxu0 %v947
    %988 = vmatpush.bf16.msra.mxu0 %v945
    %989 = vmatmul.bf16.gmra.mxu0 %v966
    %v990 = vpop.f32.mrf.mxu0
    %v991 = vadd.f32 0.0, %v990
    %v992 = vpop.f32.mrf.mxu0
    %993 = vdwg.mxu0
    %v1004 = vunpack.c.l.b16 %v889
    %v1005 = vunpack.c.h.b16 %v889
    %v1006 = vunpack.c.l.b16 %v890
    %v1007 = vunpack.c.h.b16 %v890
    %v1008 = vunpack.c.l.b16 %v891
    %v1009 = vunpack.c.h.b16 %v891
    %v1010 = vunpack.c.l.b16 %v892
    %v1011 = vunpack.c.h.b16 %v892
    %v1012 = vunpack.c.l.b16 %v893
    %v1013 = vunpack.c.h.b16 %v893
    %v1014 = vunpack.c.l.b16 %v894
    %v1015 = vunpack.c.h.b16 %v894
    %v1016 = vunpack.c.l.b16 %v895
    %v1017 = vunpack.c.h.b16 %v895
    %v1018 = vunpack.c.l.b16 %v896
    %v1019 = vunpack.c.h.b16 %v896
    %v1020 = vunpack.c.l.b16 %v897
    %v1021 = vunpack.c.h.b16 %v897
    %v1022 = vunpack.c.l.b16 %v898
    %v1023 = vunpack.c.h.b16 %v898
    %v1024 = vpack.c.b16 %v1006, %v1004
    %v1025 = vpack.c.b16 %v1007, %v1005
    %v1026 = vpack.c.b16 %v1010, %v1008
    %v1027 = vpack.c.b16 %v1011, %v1009
    %v1028 = vpack.c.b16 %v1014, %v1012
    %v1029 = vpack.c.b16 %v1015, %v1013
    %v1030 = vpack.c.b16 %v1018, %v1016
    %v1031 = vpack.c.b16 %v1019, %v1017
    %v1032 = vpack.c.b16 %v1022, %v1020
    %v1033 = vpack.c.b16 %v1023, %v1021
    %v1045 = vsel %vm964, %v885, 0
    %1047 = vmatpush.bf16.msra.mxu0 0
    %1048 = vmatpush.bf16.msra.mxu0 0
    %1049 = vmatpush.bf16.msra.mxu0 0
    %1050 = vmatpush.bf16.msra.mxu0 %v1032
    %1051 = vmatpush.bf16.msra.mxu0 %v1030
    %1052 = vmatpush.bf16.msra.mxu0 %v1028
    %1053 = vmatpush.bf16.msra.mxu0 %v1026
    %1054 = vmatpush.bf16.msra.mxu0 %v1024
    %1055 = vmatmul.bf16.gmra.mxu0 %v1045
    %v1056 = vpop.f32.mrf.mxu0
    %v1057 = vadd.f32 %v978, %v1056
    %v1058 = vpop.f32.mrf.mxu0
    %1059 = vdwg.mxu0
    %1060 = vmatpush.bf16.msra.mxu0 0
    %1061 = vmatpush.bf16.msra.mxu0 0
    %1062 = vmatpush.bf16.msra.mxu0 0
    %1063 = vmatpush.bf16.msra.mxu0 %v1033
    %1064 = vmatpush.bf16.msra.mxu0 %v1031
    %1065 = vmatpush.bf16.msra.mxu0 %v1029
    %1066 = vmatpush.bf16.msra.mxu0 %v1027
    %1067 = vmatpush.bf16.msra.mxu0 %v1025
    %1068 = vmatmul.bf16.gmra.mxu0 %v1045
    %v1069 = vpop.f32.mrf.mxu0
    %v1070 = vadd.f32 %v991, %v1069
    %v1071 = vpop.f32.mrf.mxu0
    %1072 = vdwg.mxu0
    %s1073 = scalar_lea.vmem [#allocation7], 160
    %v1074 = vld [vmem:[%s1073] sm:$0xff]
    %v1075 = vld [vmem:[%s1073 + $0x8] sm:$0xff]
    %v1076 = vld [vmem:[%s1073 + $0x10] sm:$0xff]
    %v1077 = vld [vmem:[%s1073 + $0x18] sm:$0xff]
    %v1078 = vld [vmem:[%s1073 + $0x20] sm:$0xff]
    %v1079 = vld [vmem:[%s1073 + $0x28] sm:$0xff]
    %v1080 = vld [vmem:[%s1073 + $0x30] sm:$0xff]
    %v1081 = vld [vmem:[%s1073 + $0x38] sm:$0xff]
    %v1082 = vld [vmem:[%s1073 + $0x40] sm:$0xff]
    %v1083 = vld [vmem:[%s1073 + $0x48] sm:$0xff]
    %v1084 = vrot.slane %v912, 2
    %v1095 = vunpack.c.l.b16 %v1074
    %v1096 = vunpack.c.h.b16 %v1074
    %v1097 = vunpack.c.l.b16 %v1075
    %v1098 = vunpack.c.h.b16 %v1075
    %v1099 = vunpack.c.l.b16 %v1076
    %v1100 = vunpack.c.h.b16 %v1076
    %v1101 = vunpack.c.l.b16 %v1077
    %v1102 = vunpack.c.h.b16 %v1077
    %v1103 = vunpack.c.l.b16 %v1078
    %v1104 = vunpack.c.h.b16 %v1078
    %v1105 = vunpack.c.l.b16 %v1079
    %v1106 = vunpack.c.h.b16 %v1079
    %v1107 = vunpack.c.l.b16 %v1080
    %v1108 = vunpack.c.h.b16 %v1080
    %v1109 = vunpack.c.l.b16 %v1081
    %v1110 = vunpack.c.h.b16 %v1081
    %v1111 = vunpack.c.l.b16 %v1082
    %v1112 = vunpack.c.h.b16 %v1082
    %v1113 = vunpack.c.l.b16 %v1083
    %v1114 = vunpack.c.h.b16 %v1083
    %v1115 = vpack.c.b16 %v1097, %v1095
    %v1116 = vpack.c.b16 %v1098, %v1096
    %v1117 = vpack.c.b16 %v1101, %v1099
    %v1118 = vpack.c.b16 %v1102, %v1100
    %v1119 = vpack.c.b16 %v1105, %v1103
    %v1120 = vpack.c.b16 %v1106, %v1104
    %v1121 = vpack.c.b16 %v1109, %v1107
    %v1122 = vpack.c.b16 %v1110, %v1108
    %v1123 = vpack.c.b16 %v1113, %v1111
    %v1124 = vpack.c.b16 %v1114, %v1112
    %v1136 = vsel %vm964, %v1084, 0
    %1138 = vmatpush.bf16.msra.mxu0 0
    %1139 = vmatpush.bf16.msra.mxu0 0
    %1140 = vmatpush.bf16.msra.mxu0 0
    %1141 = vmatpush.bf16.msra.mxu0 %v1123
    %1142 = vmatpush.bf16.msra.mxu0 %v1121
    %1143 = vmatpush.bf16.msra.mxu0 %v1119
    %1144 = vmatpush.bf16.msra.mxu0 %v1117
    %1145 = vmatpush.bf16.msra.mxu0 %v1115
    %1146 = vmatmul.bf16.gmra.mxu0 %v1136
    %v1147 = vpop.f32.mrf.mxu0
    %v1148 = vadd.f32 0.0, %v1147
    %v1149 = vpop.f32.mrf.mxu0
    %1150 = vdwg.mxu0
    %1151 = vmatpush.bf16.msra.mxu0 0
    %1152 = vmatpush.bf16.msra.mxu0 0
    %1153 = vmatpush.bf16.msra.mxu0 0
    %1154 = vmatpush.bf16.msra.mxu0 %v1124
    %1155 = vmatpush.bf16.msra.mxu0 %v1122
    %1156 = vmatpush.bf16.msra.mxu0 %v1120
    %1157 = vmatpush.bf16.msra.mxu0 %v1118
    %1158 = vmatpush.bf16.msra.mxu0 %v1116
    %1159 = vmatmul.bf16.gmra.mxu0 %v1136
    %v1160 = vpop.f32.mrf.mxu0
    %v1161 = vadd.f32 0.0, %v1160
    %v1162 = vpop.f32.mrf.mxu0
    %1163 = vdwg.mxu0
    %v1164 = vadd.f32 %v1057, %v1148
    %v1165 = vadd.f32 %v1070, %v1161
    %s1166 = scalar_lea.vmem [#allocation7], 240
    %v1167 = vld [vmem:[%s1166] sm:$0xff]
    %v1168 = vld [vmem:[%s1166 + $0x8] sm:$0xff]
    %v1169 = vld [vmem:[%s1166 + $0x10] sm:$0xff]
    %v1170 = vld [vmem:[%s1166 + $0x18] sm:$0xff]
    %v1171 = vld [vmem:[%s1166 + $0x20] sm:$0xff]
    %v1172 = vld [vmem:[%s1166 + $0x28] sm:$0xff]
    %v1173 = vld [vmem:[%s1166 + $0x30] sm:$0xff]
    %v1174 = vld [vmem:[%s1166 + $0x38] sm:$0xff]
    %v1175 = vld [vmem:[%s1166 + $0x40] sm:$0xff]
    %v1176 = vld [vmem:[%s1166 + $0x48] sm:$0xff]
    %v1177 = vrot.slane %v912, 3
    %v1188 = vunpack.c.l.b16 %v1167
    %v1189 = vunpack.c.h.b16 %v1167
    %v1190 = vunpack.c.l.b16 %v1168
    %v1191 = vunpack.c.h.b16 %v1168
    %v1192 = vunpack.c.l.b16 %v1169
    %v1193 = vunpack.c.h.b16 %v1169
    %v1194 = vunpack.c.l.b16 %v1170
    %v1195 = vunpack.c.h.b16 %v1170
    %v1196 = vunpack.c.l.b16 %v1171
    %v1197 = vunpack.c.h.b16 %v1171
    %v1198 = vunpack.c.l.b16 %v1172
    %v1199 = vunpack.c.h.b16 %v1172
    %v1200 = vunpack.c.l.b16 %v1173
    %v1201 = vunpack.c.h.b16 %v1173
    %v1202 = vunpack.c.l.b16 %v1174
    %v1203 = vunpack.c.h.b16 %v1174
    %v1204 = vunpack.c.l.b16 %v1175
    %v1205 = vunpack.c.h.b16 %v1175
    %v1206 = vunpack.c.l.b16 %v1176
    %v1207 = vunpack.c.h.b16 %v1176
    %v1208 = vpack.c.b16 %v1190, %v1188
    %v1209 = vpack.c.b16 %v1191, %v1189
    %v1210 = vpack.c.b16 %v1194, %v1192
    %v1211 = vpack.c.b16 %v1195, %v1193
    %v1212 = vpack.c.b16 %v1198, %v1196
    %v1213 = vpack.c.b16 %v1199, %v1197
    %v1214 = vpack.c.b16 %v1202, %v1200
    %v1215 = vpack.c.b16 %v1203, %v1201
    %v1216 = vpack.c.b16 %v1206, %v1204
    %v1217 = vpack.c.b16 %v1207, %v1205
    %v1229 = vsel %vm964, %v1177, 0
    %1231 = vmatpush.bf16.msra.mxu0 0
    %1232 = vmatpush.bf16.msra.mxu0 0
    %1233 = vmatpush.bf16.msra.mxu0 0
    %1234 = vmatpush.bf16.msra.mxu0 %v1216
    %1235 = vmatpush.bf16.msra.mxu0 %v1214
    %1236 = vmatpush.bf16.msra.mxu0 %v1212
    %1237 = vmatpush.bf16.msra.mxu0 %v1210
    %1238 = vmatpush.bf16.msra.mxu0 %v1208
    %1239 = vmatmul.bf16.gmra.mxu0 %v1229
    %v1240 = vpop.f32.mrf.mxu0
    %v1241 = vadd.f32 0.0, %v1240
    %v1242 = vpop.f32.mrf.mxu0
    %1243 = vdwg.mxu0
    %1244 = vmatpush.bf16.msra.mxu0 0
    %1245 = vmatpush.bf16.msra.mxu0 0
    %1246 = vmatpush.bf16.msra.mxu0 0
    %1247 = vmatpush.bf16.msra.mxu0 %v1217
    %1248 = vmatpush.bf16.msra.mxu0 %v1215
    %1249 = vmatpush.bf16.msra.mxu0 %v1213
    %1250 = vmatpush.bf16.msra.mxu0 %v1211
    %1251 = vmatpush.bf16.msra.mxu0 %v1209
    %1252 = vmatmul.bf16.gmra.mxu0 %v1229
    %v1253 = vpop.f32.mrf.mxu0
    %v1254 = vadd.f32 0.0, %v1253
    %v1255 = vpop.f32.mrf.mxu0
    %1256 = vdwg.mxu0
    %v1257 = vadd.f32 %v1164, %v1241
    %v1258 = vadd.f32 %v1165, %v1254
    %s1259 = scalar_lea.vmem [#allocation7], 320
    %v1260 = vld [vmem:[%s1259] sm:$0xff]
    %v1261 = vld [vmem:[%s1259 + $0x8] sm:$0xff]
    %v1262 = vld [vmem:[%s1259 + $0x10] sm:$0xff]
    %v1263 = vld [vmem:[%s1259 + $0x18] sm:$0xff]
    %v1264 = vld [vmem:[%s1259 + $0x20] sm:$0xff]
    %v1265 = vld [vmem:[%s1259 + $0x28] sm:$0xff]
    %v1266 = vld [vmem:[%s1259 + $0x30] sm:$0xff]
    %v1267 = vld [vmem:[%s1259 + $0x38] sm:$0xff]
    %v1268 = vld [vmem:[%s1259 + $0x40] sm:$0xff]
    %v1269 = vld [vmem:[%s1259 + $0x48] sm:$0xff]
    %v1280 = vunpack.c.l.b16 %v1260
    %v1281 = vunpack.c.h.b16 %v1260
    %v1282 = vunpack.c.l.b16 %v1261
    %v1283 = vunpack.c.h.b16 %v1261
    %v1284 = vunpack.c.l.b16 %v1262
    %v1285 = vunpack.c.h.b16 %v1262
    %v1286 = vunpack.c.l.b16 %v1263
    %v1287 = vunpack.c.h.b16 %v1263
    %v1288 = vunpack.c.l.b16 %v1264
    %v1289 = vunpack.c.h.b16 %v1264
    %v1290 = vunpack.c.l.b16 %v1265
    %v1291 = vunpack.c.h.b16 %v1265
    %v1292 = vunpack.c.l.b16 %v1266
    %v1293 = vunpack.c.h.b16 %v1266
    %v1294 = vunpack.c.l.b16 %v1267
    %v1295 = vunpack.c.h.b16 %v1267
    %v1296 = vunpack.c.l.b16 %v1268
    %v1297 = vunpack.c.h.b16 %v1268
    %v1298 = vunpack.c.l.b16 %v1269
    %v1299 = vunpack.c.h.b16 %v1269
    %v1300 = vpack.c.b16 %v1282, %v1280
    %v1301 = vpack.c.b16 %v1283, %v1281
    %v1302 = vpack.c.b16 %v1286, %v1284
    %v1303 = vpack.c.b16 %v1287, %v1285
    %v1304 = vpack.c.b16 %v1290, %v1288
    %v1305 = vpack.c.b16 %v1291, %v1289
    %v1306 = vpack.c.b16 %v1294, %v1292
    %v1307 = vpack.c.b16 %v1295, %v1293
    %v1308 = vpack.c.b16 %v1298, %v1296
    %v1309 = vpack.c.b16 %v1299, %v1297
    %v1321 = vsel %vm964, %v886, 0
    %1323 = vmatpush.bf16.msra.mxu0 0
    %1324 = vmatpush.bf16.msra.mxu0 0
    %1325 = vmatpush.bf16.msra.mxu0 0
    %1326 = vmatpush.bf16.msra.mxu0 %v1308
    %1327 = vmatpush.bf16.msra.mxu0 %v1306
    %1328 = vmatpush.bf16.msra.mxu0 %v1304
    %1329 = vmatpush.bf16.msra.mxu0 %v1302
    %1330 = vmatpush.bf16.msra.mxu0 %v1300
    %1331 = vmatmul.bf16.gmra.mxu0 %v1321
    %v1332 = vpop.f32.mrf.mxu0
    %v1333 = vadd.f32 0.0, %v1332
    %v1334 = vpop.f32.mrf.mxu0
    %1335 = vdwg.mxu0
    %1336 = vmatpush.bf16.msra.mxu0 0
    %1337 = vmatpush.bf16.msra.mxu0 0
    %1338 = vmatpush.bf16.msra.mxu0 0
    %1339 = vmatpush.bf16.msra.mxu0 %v1309
    %1340 = vmatpush.bf16.msra.mxu0 %v1307
    %1341 = vmatpush.bf16.msra.mxu0 %v1305
    %1342 = vmatpush.bf16.msra.mxu0 %v1303
    %1343 = vmatpush.bf16.msra.mxu0 %v1301
    %1344 = vmatmul.bf16.gmra.mxu0 %v1321
    %v1345 = vpop.f32.mrf.mxu0
    %v1346 = vadd.f32 0.0, %v1345
    %v1347 = vpop.f32.mrf.mxu0
    %1348 = vdwg.mxu0
    %v1349 = vadd.f32 %v1257, %v1333
    %v1350 = vadd.f32 %v1258, %v1346
    %s1351 = scalar_lea.vmem [#allocation7], 400
    %v1352 = vld [vmem:[%s1351] sm:$0xff]
    %v1353 = vld [vmem:[%s1351 + $0x8] sm:$0xff]
    %v1354 = vld [vmem:[%s1351 + $0x10] sm:$0xff]
    %v1355 = vld [vmem:[%s1351 + $0x18] sm:$0xff]
    %v1356 = vld [vmem:[%s1351 + $0x20] sm:$0xff]
    %v1357 = vld [vmem:[%s1351 + $0x28] sm:$0xff]
    %v1358 = vld [vmem:[%s1351 + $0x30] sm:$0xff]
    %v1359 = vld [vmem:[%s1351 + $0x38] sm:$0xff]
    %v1360 = vld [vmem:[%s1351 + $0x40] sm:$0xff]
    %v1361 = vld [vmem:[%s1351 + $0x48] sm:$0xff]
    %v1363 = vunpack.c.l.b16 %v886
    %v1364 = vpack.c.b16 %v1363, %v1363
    %v1365 = vrot.slane %v1364, 1
    %v1376 = vunpack.c.l.b16 %v1352
    %v1377 = vunpack.c.h.b16 %v1352
    %v1378 = vunpack.c.l.b16 %v1353
    %v1379 = vunpack.c.h.b16 %v1353
    %v1380 = vunpack.c.l.b16 %v1354
    %v1381 = vunpack.c.h.b16 %v1354
    %v1382 = vunpack.c.l.b16 %v1355
    %v1383 = vunpack.c.h.b16 %v1355
    %v1384 = vunpack.c.l.b16 %v1356
    %v1385 = vunpack.c.h.b16 %v1356
    %v1386 = vunpack.c.l.b16 %v1357
    %v1387 = vunpack.c.h.b16 %v1357
    %v1388 = vunpack.c.l.b16 %v1358
    %v1389 = vunpack.c.h.b16 %v1358
    %v1390 = vunpack.c.l.b16 %v1359
    %v1391 = vunpack.c.h.b16 %v1359
    %v1392 = vunpack.c.l.b16 %v1360
    %v1393 = vunpack.c.h.b16 %v1360
    %v1394 = vunpack.c.l.b16 %v1361
    %v1395 = vunpack.c.h.b16 %v1361
    %v1396 = vpack.c.b16 %v1378, %v1376
    %v1397 = vpack.c.b16 %v1379, %v1377
    %v1398 = vpack.c.b16 %v1382, %v1380
    %v1399 = vpack.c.b16 %v1383, %v1381
    %v1400 = vpack.c.b16 %v1386, %v1384
    %v1401 = vpack.c.b16 %v1387, %v1385
    %v1402 = vpack.c.b16 %v1390, %v1388
    %v1403 = vpack.c.b16 %v1391, %v1389
    %v1404 = vpack.c.b16 %v1394, %v1392
    %v1405 = vpack.c.b16 %v1395, %v1393
    %v1417 = vsel %vm964, %v1365, 0
    %1419 = vmatpush.bf16.msra.mxu0 0
    %1420 = vmatpush.bf16.msra.mxu0 0
    %1421 = vmatpush.bf16.msra.mxu0 0
    %1422 = vmatpush.bf16.msra.mxu0 %v1404
    %1423 = vmatpush.bf16.msra.mxu0 %v1402
    %1424 = vmatpush.bf16.msra.mxu0 %v1400
    %1425 = vmatpush.bf16.msra.mxu0 %v1398
    %1426 = vmatpush.bf16.msra.mxu0 %v1396
    %1427 = vmatmul.bf16.gmra.mxu0 %v1417
    %v1428 = vpop.f32.mrf.mxu0
    %v1429 = vadd.f32 0.0, %v1428
    %v1430 = vpop.f32.mrf.mxu0
    %1431 = vdwg.mxu0
    %1432 = vmatpush.bf16.msra.mxu0 0
    %1433 = vmatpush.bf16.msra.mxu0 0
    %1434 = vmatpush.bf16.msra.mxu0 0
    %1435 = vmatpush.bf16.msra.mxu0 %v1405
    %1436 = vmatpush.bf16.msra.mxu0 %v1403
    %1437 = vmatpush.bf16.msra.mxu0 %v1401
    %1438 = vmatpush.bf16.msra.mxu0 %v1399
    %1439 = vmatpush.bf16.msra.mxu0 %v1397
    %1440 = vmatmul.bf16.gmra.mxu0 %v1417
    %v1441 = vpop.f32.mrf.mxu0
    %v1442 = vadd.f32 0.0, %v1441
    %v1443 = vpop.f32.mrf.mxu0
    %1444 = vdwg.mxu0
    %v1445 = vadd.f32 %v1349, %v1429
    %v1446 = vadd.f32 %v1350, %v1442
    %s1447 = scalar_lea.vmem [#allocation7], 480
    %v1448 = vld [vmem:[%s1447] sm:$0xff]
    %v1449 = vld [vmem:[%s1447 + $0x8] sm:$0xff]
    %v1450 = vld [vmem:[%s1447 + $0x10] sm:$0xff]
    %v1451 = vld [vmem:[%s1447 + $0x18] sm:$0xff]
    %v1452 = vld [vmem:[%s1447 + $0x20] sm:$0xff]
    %v1453 = vld [vmem:[%s1447 + $0x28] sm:$0xff]
    %v1454 = vld [vmem:[%s1447 + $0x30] sm:$0xff]
    %v1455 = vld [vmem:[%s1447 + $0x38] sm:$0xff]
    %v1456 = vld [vmem:[%s1447 + $0x40] sm:$0xff]
    %v1457 = vld [vmem:[%s1447 + $0x48] sm:$0xff]
    %v1458 = vrot.slane %v1364, 2
    %v1469 = vunpack.c.l.b16 %v1448
    %v1470 = vunpack.c.h.b16 %v1448
    %v1471 = vunpack.c.l.b16 %v1449
    %v1472 = vunpack.c.h.b16 %v1449
    %v1473 = vunpack.c.l.b16 %v1450
    %v1474 = vunpack.c.h.b16 %v1450
    %v1475 = vunpack.c.l.b16 %v1451
    %v1476 = vunpack.c.h.b16 %v1451
    %v1477 = vunpack.c.l.b16 %v1452
    %v1478 = vunpack.c.h.b16 %v1452
    %v1479 = vunpack.c.l.b16 %v1453
    %v1480 = vunpack.c.h.b16 %v1453
    %v1481 = vunpack.c.l.b16 %v1454
    %v1482 = vunpack.c.h.b16 %v1454
    %v1483 = vunpack.c.l.b16 %v1455
    %v1484 = vunpack.c.h.b16 %v1455
    %v1485 = vunpack.c.l.b16 %v1456
    %v1486 = vunpack.c.h.b16 %v1456
    %v1487 = vunpack.c.l.b16 %v1457
    %v1488 = vunpack.c.h.b16 %v1457
    %v1489 = vpack.c.b16 %v1471, %v1469
    %v1490 = vpack.c.b16 %v1472, %v1470
    %v1491 = vpack.c.b16 %v1475, %v1473
    %v1492 = vpack.c.b16 %v1476, %v1474
    %v1493 = vpack.c.b16 %v1479, %v1477
    %v1494 = vpack.c.b16 %v1480, %v1478
    %v1495 = vpack.c.b16 %v1483, %v1481
    %v1496 = vpack.c.b16 %v1484, %v1482
    %v1497 = vpack.c.b16 %v1487, %v1485
    %v1498 = vpack.c.b16 %v1488, %v1486
    %v1510 = vsel %vm964, %v1458, 0
    %1512 = vmatpush.bf16.msra.mxu0 0
    %1513 = vmatpush.bf16.msra.mxu0 0
    %1514 = vmatpush.bf16.msra.mxu0 0
    %1515 = vmatpush.bf16.msra.mxu0 %v1497
    %1516 = vmatpush.bf16.msra.mxu0 %v1495
    %1517 = vmatpush.bf16.msra.mxu0 %v1493
    %1518 = vmatpush.bf16.msra.mxu0 %v1491
    %1519 = vmatpush.bf16.msra.mxu0 %v1489
    %1520 = vmatmul.bf16.gmra.mxu0 %v1510
    %v1521 = vpop.f32.mrf.mxu0
    %v1522 = vadd.f32 0.0, %v1521
    %v1523 = vpop.f32.mrf.mxu0
    %1524 = vdwg.mxu0
    %1525 = vmatpush.bf16.msra.mxu0 0
    %1526 = vmatpush.bf16.msra.mxu0 0
    %1527 = vmatpush.bf16.msra.mxu0 0
    %1528 = vmatpush.bf16.msra.mxu0 %v1498
    %1529 = vmatpush.bf16.msra.mxu0 %v1496
    %1530 = vmatpush.bf16.msra.mxu0 %v1494
    %1531 = vmatpush.bf16.msra.mxu0 %v1492
    %1532 = vmatpush.bf16.msra.mxu0 %v1490
    %1533 = vmatmul.bf16.gmra.mxu0 %v1510
    %v1534 = vpop.f32.mrf.mxu0
    %v1535 = vadd.f32 0.0, %v1534
    %v1536 = vpop.f32.mrf.mxu0
    %1537 = vdwg.mxu0
    %v1538 = vadd.f32 %v1445, %v1522
    %v1539 = vadd.f32 %v1446, %v1535
    %s1540 = scalar_lea.vmem [#allocation7], 560
    %v1541 = vld [vmem:[%s1540] sm:$0xff]
    %v1542 = vld [vmem:[%s1540 + $0x8] sm:$0xff]
    %v1543 = vld [vmem:[%s1540 + $0x10] sm:$0xff]
    %v1544 = vld [vmem:[%s1540 + $0x18] sm:$0xff]
    %v1545 = vld [vmem:[%s1540 + $0x20] sm:$0xff]
    %v1546 = vld [vmem:[%s1540 + $0x28] sm:$0xff]
    %v1547 = vld [vmem:[%s1540 + $0x30] sm:$0xff]
    %v1548 = vld [vmem:[%s1540 + $0x38] sm:$0xff]
    %v1549 = vld [vmem:[%s1540 + $0x40] sm:$0xff]
    %v1550 = vld [vmem:[%s1540 + $0x48] sm:$0xff]
    %v1551 = vrot.slane %v1364, 3
    %v1562 = vunpack.c.l.b16 %v1541
    %v1563 = vunpack.c.h.b16 %v1541
    %v1564 = vunpack.c.l.b16 %v1542
    %v1565 = vunpack.c.h.b16 %v1542
    %v1566 = vunpack.c.l.b16 %v1543
    %v1567 = vunpack.c.h.b16 %v1543
    %v1568 = vunpack.c.l.b16 %v1544
    %v1569 = vunpack.c.h.b16 %v1544
    %v1570 = vunpack.c.l.b16 %v1545
    %v1571 = vunpack.c.h.b16 %v1545
    %v1572 = vunpack.c.l.b16 %v1546
    %v1573 = vunpack.c.h.b16 %v1546
    %v1574 = vunpack.c.l.b16 %v1547
    %v1575 = vunpack.c.h.b16 %v1547
    %v1576 = vunpack.c.l.b16 %v1548
    %v1577 = vunpack.c.h.b16 %v1548
    %v1578 = vunpack.c.l.b16 %v1549
    %v1579 = vunpack.c.h.b16 %v1549
    %v1580 = vunpack.c.l.b16 %v1550
    %v1581 = vunpack.c.h.b16 %v1550
    %v1582 = vpack.c.b16 %v1564, %v1562
    %v1583 = vpack.c.b16 %v1565, %v1563
    %v1584 = vpack.c.b16 %v1568, %v1566
    %v1585 = vpack.c.b16 %v1569, %v1567
    %v1586 = vpack.c.b16 %v1572, %v1570
    %v1587 = vpack.c.b16 %v1573, %v1571
    %v1588 = vpack.c.b16 %v1576, %v1574
    %v1589 = vpack.c.b16 %v1577, %v1575
    %v1590 = vpack.c.b16 %v1580, %v1578
    %v1591 = vpack.c.b16 %v1581, %v1579
    %v1603 = vsel %vm964, %v1551, 0
    %1605 = vmatpush.bf16.msra.mxu0 0
    %1606 = vmatpush.bf16.msra.mxu0 0
    %1607 = vmatpush.bf16.msra.mxu0 0
    %1608 = vmatpush.bf16.msra.mxu0 %v1590
    %1609 = vmatpush.bf16.msra.mxu0 %v1588
    %1610 = vmatpush.bf16.msra.mxu0 %v1586
    %1611 = vmatpush.bf16.msra.mxu0 %v1584
    %1612 = vmatpush.bf16.msra.mxu0 %v1582
    %1613 = vmatmul.bf16.gmra.mxu0 %v1603
    %v1614 = vpop.f32.mrf.mxu0
    %v1615 = vadd.f32 0.0, %v1614
    %v1616 = vpop.f32.mrf.mxu0
    %1617 = vdwg.mxu0
    %1618 = vmatpush.bf16.msra.mxu0 0
    %1619 = vmatpush.bf16.msra.mxu0 0
    %1620 = vmatpush.bf16.msra.mxu0 0
    %1621 = vmatpush.bf16.msra.mxu0 %v1591
    %1622 = vmatpush.bf16.msra.mxu0 %v1589
    %1623 = vmatpush.bf16.msra.mxu0 %v1587
    %1624 = vmatpush.bf16.msra.mxu0 %v1585
    %1625 = vmatpush.bf16.msra.mxu0 %v1583
    %1626 = vmatmul.bf16.gmra.mxu0 %v1603
    %v1627 = vpop.f32.mrf.mxu0
    %v1628 = vadd.f32 0.0, %v1627
    %v1629 = vpop.f32.mrf.mxu0
    %1630 = vdwg.mxu0
    %v1631 = vadd.f32 %v1538, %v1615
    %v1632 = vadd.f32 %v1539, %v1628
    %s1633 = scalar_lea.vmem [#allocation7], 640
    %v1634 = vld [vmem:[%s1633] sm:$0xff]
    %v1635 = vld [vmem:[%s1633 + $0x8] sm:$0xff]
    %v1636 = vld [vmem:[%s1633 + $0x10] sm:$0xff]
    %v1637 = vld [vmem:[%s1633 + $0x18] sm:$0xff]
    %v1638 = vld [vmem:[%s1633 + $0x20] sm:$0xff]
    %v1639 = vld [vmem:[%s1633 + $0x28] sm:$0xff]
    %v1640 = vld [vmem:[%s1633 + $0x30] sm:$0xff]
    %v1641 = vld [vmem:[%s1633 + $0x38] sm:$0xff]
    %v1642 = vld [vmem:[%s1633 + $0x40] sm:$0xff]
    %v1643 = vld [vmem:[%s1633 + $0x48] sm:$0xff]
    %v1654 = vunpack.c.l.b16 %v1634
    %v1655 = vunpack.c.h.b16 %v1634
    %v1656 = vunpack.c.l.b16 %v1635
    %v1657 = vunpack.c.h.b16 %v1635
    %v1658 = vunpack.c.l.b16 %v1636
    %v1659 = vunpack.c.h.b16 %v1636
    %v1660 = vunpack.c.l.b16 %v1637
    %v1661 = vunpack.c.h.b16 %v1637
    %v1662 = vunpack.c.l.b16 %v1638
    %v1663 = vunpack.c.h.b16 %v1638
    %v1664 = vunpack.c.l.b16 %v1639
    %v1665 = vunpack.c.h.b16 %v1639
    %v1666 = vunpack.c.l.b16 %v1640
    %v1667 = vunpack.c.h.b16 %v1640
    %v1668 = vunpack.c.l.b16 %v1641
    %v1669 = vunpack.c.h.b16 %v1641
    %v1670 = vunpack.c.l.b16 %v1642
    %v1671 = vunpack.c.h.b16 %v1642
    %v1672 = vunpack.c.l.b16 %v1643
    %v1673 = vunpack.c.h.b16 %v1643
    %v1674 = vpack.c.b16 %v1656, %v1654
    %v1675 = vpack.c.b16 %v1657, %v1655
    %v1676 = vpack.c.b16 %v1660, %v1658
    %v1677 = vpack.c.b16 %v1661, %v1659
    %v1678 = vpack.c.b16 %v1664, %v1662
    %v1679 = vpack.c.b16 %v1665, %v1663
    %v1680 = vpack.c.b16 %v1668, %v1666
    %v1681 = vpack.c.b16 %v1669, %v1667
    %v1682 = vpack.c.b16 %v1672, %v1670
    %v1683 = vpack.c.b16 %v1673, %v1671
    %v1695 = vsel %vm964, %v887, 0
    %1697 = vmatpush.bf16.msra.mxu0 0
    %1698 = vmatpush.bf16.msra.mxu0 0
    %1699 = vmatpush.bf16.msra.mxu0 0
    %1700 = vmatpush.bf16.msra.mxu0 %v1682
    %1701 = vmatpush.bf16.msra.mxu0 %v1680
    %1702 = vmatpush.bf16.msra.mxu0 %v1678
    %1703 = vmatpush.bf16.msra.mxu0 %v1676
    %1704 = vmatpush.bf16.msra.mxu0 %v1674
    %1705 = vmatmul.bf16.gmra.mxu0 %v1695
    %v1706 = vpop.f32.mrf.mxu0
    %v1707 = vadd.f32 0.0, %v1706
    %v1708 = vpop.f32.mrf.mxu0
    %1709 = vdwg.mxu0
    %1710 = vmatpush.bf16.msra.mxu0 0
    %1711 = vmatpush.bf16.msra.mxu0 0
    %1712 = vmatpush.bf16.msra.mxu0 0
    %1713 = vmatpush.bf16.msra.mxu0 %v1683
    %1714 = vmatpush.bf16.msra.mxu0 %v1681
    %1715 = vmatpush.bf16.msra.mxu0 %v1679
    %1716 = vmatpush.bf16.msra.mxu0 %v1677
    %1717 = vmatpush.bf16.msra.mxu0 %v1675
    %1718 = vmatmul.bf16.gmra.mxu0 %v1695
    %v1719 = vpop.f32.mrf.mxu0
    %v1720 = vadd.f32 0.0, %v1719
    %v1721 = vpop.f32.mrf.mxu0
    %1722 = vdwg.mxu0
    %v1723 = vadd.f32 %v1631, %v1707
    %v1724 = vadd.f32 %v1632, %v1720
    %s1725 = scalar_lea.vmem [#allocation7], 720
    %v1726 = vld [vmem:[%s1725] sm:$0xff]
    %v1727 = vld [vmem:[%s1725 + $0x8] sm:$0xff]
    %v1728 = vld [vmem:[%s1725 + $0x10] sm:$0xff]
    %v1729 = vld [vmem:[%s1725 + $0x18] sm:$0xff]
    %v1730 = vld [vmem:[%s1725 + $0x20] sm:$0xff]
    %v1731 = vld [vmem:[%s1725 + $0x28] sm:$0xff]
    %v1732 = vld [vmem:[%s1725 + $0x30] sm:$0xff]
    %v1733 = vld [vmem:[%s1725 + $0x38] sm:$0xff]
    %v1734 = vld [vmem:[%s1725 + $0x40] sm:$0xff]
    %v1735 = vld [vmem:[%s1725 + $0x48] sm:$0xff]
    %v1737 = vunpack.c.l.b16 %v887
    %v1738 = vpack.c.b16 %v1737, %v1737
    %v1739 = vrot.slane %v1738, 1
    %v1750 = vunpack.c.l.b16 %v1726
    %v1751 = vunpack.c.h.b16 %v1726
    %v1752 = vunpack.c.l.b16 %v1727
    %v1753 = vunpack.c.h.b16 %v1727
    %v1754 = vunpack.c.l.b16 %v1728
    %v1755 = vunpack.c.h.b16 %v1728
    %v1756 = vunpack.c.l.b16 %v1729
    %v1757 = vunpack.c.h.b16 %v1729
    %v1758 = vunpack.c.l.b16 %v1730
    %v1759 = vunpack.c.h.b16 %v1730
    %v1760 = vunpack.c.l.b16 %v1731
    %v1761 = vunpack.c.h.b16 %v1731
    %v1762 = vunpack.c.l.b16 %v1732
    %v1763 = vunpack.c.h.b16 %v1732
    %v1764 = vunpack.c.l.b16 %v1733
    %v1765 = vunpack.c.h.b16 %v1733
    %v1766 = vunpack.c.l.b16 %v1734
    %v1767 = vunpack.c.h.b16 %v1734
    %v1768 = vunpack.c.l.b16 %v1735
    %v1769 = vunpack.c.h.b16 %v1735
    %v1770 = vpack.c.b16 %v1752, %v1750
    %v1771 = vpack.c.b16 %v1753, %v1751
    %v1772 = vpack.c.b16 %v1756, %v1754
    %v1773 = vpack.c.b16 %v1757, %v1755
    %v1774 = vpack.c.b16 %v1760, %v1758
    %v1775 = vpack.c.b16 %v1761, %v1759
    %v1776 = vpack.c.b16 %v1764, %v1762
    %v1777 = vpack.c.b16 %v1765, %v1763
    %v1778 = vpack.c.b16 %v1768, %v1766
    %v1779 = vpack.c.b16 %v1769, %v1767
    %v1791 = vsel %vm964, %v1739, 0
    %1793 = vmatpush.bf16.msra.mxu0 0
    %1794 = vmatpush.bf16.msra.mxu0 0
    %1795 = vmatpush.bf16.msra.mxu0 0
    %1796 = vmatpush.bf16.msra.mxu0 %v1778
    %1797 = vmatpush.bf16.msra.mxu0 %v1776
    %1798 = vmatpush.bf16.msra.mxu0 %v1774
    %1799 = vmatpush.bf16.msra.mxu0 %v1772
    %1800 = vmatpush.bf16.msra.mxu0 %v1770
    %1801 = vmatmul.bf16.gmra.mxu0 %v1791
    %v1802 = vpop.f32.mrf.mxu0
    %v1803 = vadd.f32 0.0, %v1802
    %v1804 = vpop.f32.mrf.mxu0
    %1805 = vdwg.mxu0
    %1806 = vmatpush.bf16.msra.mxu0 0
    %1807 = vmatpush.bf16.msra.mxu0 0
    %1808 = vmatpush.bf16.msra.mxu0 0
    %1809 = vmatpush.bf16.msra.mxu0 %v1779
    %1810 = vmatpush.bf16.msra.mxu0 %v1777
    %1811 = vmatpush.bf16.msra.mxu0 %v1775
    %1812 = vmatpush.bf16.msra.mxu0 %v1773
    %1813 = vmatpush.bf16.msra.mxu0 %v1771
    %1814 = vmatmul.bf16.gmra.mxu0 %v1791
    %v1815 = vpop.f32.mrf.mxu0
    %v1816 = vadd.f32 0.0, %v1815
    %v1817 = vpop.f32.mrf.mxu0
    %1818 = vdwg.mxu0
    %v1819 = vadd.f32 %v1723, %v1803
    %v1820 = vadd.f32 %v1724, %v1816
    %s1821 = scalar_lea.vmem [#allocation7], 800
    %v1822 = vld [vmem:[%s1821] sm:$0xff]
    %v1823 = vld [vmem:[%s1821 + $0x8] sm:$0xff]
    %v1824 = vld [vmem:[%s1821 + $0x10] sm:$0xff]
    %v1825 = vld [vmem:[%s1821 + $0x18] sm:$0xff]
    %v1826 = vld [vmem:[%s1821 + $0x20] sm:$0xff]
    %v1827 = vld [vmem:[%s1821 + $0x28] sm:$0xff]
    %v1828 = vld [vmem:[%s1821 + $0x30] sm:$0xff]
    %v1829 = vld [vmem:[%s1821 + $0x38] sm:$0xff]
    %v1830 = vld [vmem:[%s1821 + $0x40] sm:$0xff]
    %v1831 = vld [vmem:[%s1821 + $0x48] sm:$0xff]
    %v1832 = vrot.slane %v1738, 2
    %v1843 = vunpack.c.l.b16 %v1822
    %v1844 = vunpack.c.h.b16 %v1822
    %v1845 = vunpack.c.l.b16 %v1823
    %v1846 = vunpack.c.h.b16 %v1823
    %v1847 = vunpack.c.l.b16 %v1824
    %v1848 = vunpack.c.h.b16 %v1824
    %v1849 = vunpack.c.l.b16 %v1825
    %v1850 = vunpack.c.h.b16 %v1825
    %v1851 = vunpack.c.l.b16 %v1826
    %v1852 = vunpack.c.h.b16 %v1826
    %v1853 = vunpack.c.l.b16 %v1827
    %v1854 = vunpack.c.h.b16 %v1827
    %v1855 = vunpack.c.l.b16 %v1828
    %v1856 = vunpack.c.h.b16 %v1828
    %v1857 = vunpack.c.l.b16 %v1829
    %v1858 = vunpack.c.h.b16 %v1829
    %v1859 = vunpack.c.l.b16 %v1830
    %v1860 = vunpack.c.h.b16 %v1830
    %v1861 = vunpack.c.l.b16 %v1831
    %v1862 = vunpack.c.h.b16 %v1831
    %v1863 = vpack.c.b16 %v1845, %v1843
    %v1864 = vpack.c.b16 %v1846, %v1844
    %v1865 = vpack.c.b16 %v1849, %v1847
    %v1866 = vpack.c.b16 %v1850, %v1848
    %v1867 = vpack.c.b16 %v1853, %v1851
    %v1868 = vpack.c.b16 %v1854, %v1852
    %v1869 = vpack.c.b16 %v1857, %v1855
    %v1870 = vpack.c.b16 %v1858, %v1856
    %v1871 = vpack.c.b16 %v1861, %v1859
    %v1872 = vpack.c.b16 %v1862, %v1860
    %v1884 = vsel %vm964, %v1832, 0
    %1886 = vmatpush.bf16.msra.mxu0 0
    %1887 = vmatpush.bf16.msra.mxu0 0
    %1888 = vmatpush.bf16.msra.mxu0 0
    %1889 = vmatpush.bf16.msra.mxu0 %v1871
    %1890 = vmatpush.bf16.msra.mxu0 %v1869
    %1891 = vmatpush.bf16.msra.mxu0 %v1867
    %1892 = vmatpush.bf16.msra.mxu0 %v1865
    %1893 = vmatpush.bf16.msra.mxu0 %v1863
    %1894 = vmatmul.bf16.gmra.mxu0 %v1884
    %v1895 = vpop.f32.mrf.mxu0
    %v1896 = vadd.f32 0.0, %v1895
    %v1897 = vpop.f32.mrf.mxu0
    %1898 = vdwg.mxu0
    %1899 = vmatpush.bf16.msra.mxu0 0
    %1900 = vmatpush.bf16.msra.mxu0 0
    %1901 = vmatpush.bf16.msra.mxu0 0
    %1902 = vmatpush.bf16.msra.mxu0 %v1872
    %1903 = vmatpush.bf16.msra.mxu0 %v1870
    %1904 = vmatpush.bf16.msra.mxu0 %v1868
    %1905 = vmatpush.bf16.msra.mxu0 %v1866
    %1906 = vmatpush.bf16.msra.mxu0 %v1864
    %1907 = vmatmul.bf16.gmra.mxu0 %v1884
    %v1908 = vpop.f32.mrf.mxu0
    %v1909 = vadd.f32 0.0, %v1908
    %v1910 = vpop.f32.mrf.mxu0
    %1911 = vdwg.mxu0
    %v1912 = vadd.f32 %v1819, %v1896
    %v1913 = vadd.f32 %v1820, %v1909
    %s1914 = scalar_lea.vmem [#allocation7], 880
    %v1915 = vld [vmem:[%s1914] sm:$0xff]
    %v1916 = vld [vmem:[%s1914 + $0x8] sm:$0xff]
    %v1917 = vld [vmem:[%s1914 + $0x10] sm:$0xff]
    %v1918 = vld [vmem:[%s1914 + $0x18] sm:$0xff]
    %v1919 = vld [vmem:[%s1914 + $0x20] sm:$0xff]
    %v1920 = vld [vmem:[%s1914 + $0x28] sm:$0xff]
    %v1921 = vld [vmem:[%s1914 + $0x30] sm:$0xff]
    %v1922 = vld [vmem:[%s1914 + $0x38] sm:$0xff]
    %v1923 = vld [vmem:[%s1914 + $0x40] sm:$0xff]
    %v1924 = vld [vmem:[%s1914 + $0x48] sm:$0xff]
    %v1925 = vrot.slane %v1738, 3
    %v1936 = vunpack.c.l.b16 %v1915
    %v1937 = vunpack.c.h.b16 %v1915
    %v1938 = vunpack.c.l.b16 %v1916
    %v1939 = vunpack.c.h.b16 %v1916
    %v1940 = vunpack.c.l.b16 %v1917
    %v1941 = vunpack.c.h.b16 %v1917
    %v1942 = vunpack.c.l.b16 %v1918
    %v1943 = vunpack.c.h.b16 %v1918
    %v1944 = vunpack.c.l.b16 %v1919
    %v1945 = vunpack.c.h.b16 %v1919
    %v1946 = vunpack.c.l.b16 %v1920
    %v1947 = vunpack.c.h.b16 %v1920
    %v1948 = vunpack.c.l.b16 %v1921
    %v1949 = vunpack.c.h.b16 %v1921
    %v1950 = vunpack.c.l.b16 %v1922
    %v1951 = vunpack.c.h.b16 %v1922
    %v1952 = vunpack.c.l.b16 %v1923
    %v1953 = vunpack.c.h.b16 %v1923
    %v1954 = vunpack.c.l.b16 %v1924
    %v1955 = vunpack.c.h.b16 %v1924
    %v1956 = vpack.c.b16 %v1938, %v1936
    %v1957 = vpack.c.b16 %v1939, %v1937
    %v1958 = vpack.c.b16 %v1942, %v1940
    %v1959 = vpack.c.b16 %v1943, %v1941
    %v1960 = vpack.c.b16 %v1946, %v1944
    %v1961 = vpack.c.b16 %v1947, %v1945
    %v1962 = vpack.c.b16 %v1950, %v1948
    %v1963 = vpack.c.b16 %v1951, %v1949
    %v1964 = vpack.c.b16 %v1954, %v1952
    %v1965 = vpack.c.b16 %v1955, %v1953
    %v1977 = vsel %vm964, %v1925, 0
    %1979 = vmatpush.bf16.msra.mxu0 0
    %1980 = vmatpush.bf16.msra.mxu0 0
    %1981 = vmatpush.bf16.msra.mxu0 0
    %1982 = vmatpush.bf16.msra.mxu0 %v1964
    %1983 = vmatpush.bf16.msra.mxu0 %v1962
    %1984 = vmatpush.bf16.msra.mxu0 %v1960
    %1985 = vmatpush.bf16.msra.mxu0 %v1958
    %1986 = vmatpush.bf16.msra.mxu0 %v1956
    %1987 = vmatmul.bf16.gmra.mxu0 %v1977
    %v1988 = vpop.f32.mrf.mxu0
    %v1989 = vadd.f32 0.0, %v1988
    %v1990 = vpop.f32.mrf.mxu0
    %1991 = vdwg.mxu0
    %1992 = vmatpush.bf16.msra.mxu0 0
    %1993 = vmatpush.bf16.msra.mxu0 0
    %1994 = vmatpush.bf16.msra.mxu0 0
    %1995 = vmatpush.bf16.msra.mxu0 %v1965
    %1996 = vmatpush.bf16.msra.mxu0 %v1963
    %1997 = vmatpush.bf16.msra.mxu0 %v1961
    %1998 = vmatpush.bf16.msra.mxu0 %v1959
    %1999 = vmatpush.bf16.msra.mxu0 %v1957
    %2000 = vmatmul.bf16.gmra.mxu0 %v1977
    %v2001 = vpop.f32.mrf.mxu0
    %v2002 = vadd.f32 0.0, %v2001
    %v2003 = vpop.f32.mrf.mxu0
    %2004 = vdwg.mxu0
    %v2005 = vadd.f32 %v1912, %v1989
    %v2006 = vadd.f32 %v1913, %v2002
    %s2007 = scalar_lea.vmem [#allocation7], 960
    %v2008 = vld [vmem:[%s2007] sm:$0xff]
    %v2009 = vld [vmem:[%s2007 + $0x8] sm:$0xff]
    %v2010 = vld [vmem:[%s2007 + $0x10] sm:$0xff]
    %v2011 = vld [vmem:[%s2007 + $0x18] sm:$0xff]
    %v2012 = vld [vmem:[%s2007 + $0x20] sm:$0xff]
    %v2013 = vld [vmem:[%s2007 + $0x28] sm:$0xff]
    %v2014 = vld [vmem:[%s2007 + $0x30] sm:$0xff]
    %v2015 = vld [vmem:[%s2007 + $0x38] sm:$0xff]
    %v2016 = vld [vmem:[%s2007 + $0x40] sm:$0xff]
    %v2017 = vld [vmem:[%s2007 + $0x48] sm:$0xff]
    %v2028 = vunpack.c.l.b16 %v2008
    %v2029 = vunpack.c.h.b16 %v2008
    %v2030 = vunpack.c.l.b16 %v2009
    %v2031 = vunpack.c.h.b16 %v2009
    %v2032 = vunpack.c.l.b16 %v2010
    %v2033 = vunpack.c.h.b16 %v2010
    %v2034 = vunpack.c.l.b16 %v2011
    %v2035 = vunpack.c.h.b16 %v2011
    %v2036 = vunpack.c.l.b16 %v2012
    %v2037 = vunpack.c.h.b16 %v2012
    %v2038 = vunpack.c.l.b16 %v2013
    %v2039 = vunpack.c.h.b16 %v2013
    %v2040 = vunpack.c.l.b16 %v2014
    %v2041 = vunpack.c.h.b16 %v2014
    %v2042 = vunpack.c.l.b16 %v2015
    %v2043 = vunpack.c.h.b16 %v2015
    %v2044 = vunpack.c.l.b16 %v2016
    %v2045 = vunpack.c.h.b16 %v2016
    %v2046 = vunpack.c.l.b16 %v2017
    %v2047 = vunpack.c.h.b16 %v2017
    %v2048 = vpack.c.b16 %v2030, %v2028
    %v2049 = vpack.c.b16 %v2031, %v2029
    %v2050 = vpack.c.b16 %v2034, %v2032
    %v2051 = vpack.c.b16 %v2035, %v2033
    %v2052 = vpack.c.b16 %v2038, %v2036
    %v2053 = vpack.c.b16 %v2039, %v2037
    %v2054 = vpack.c.b16 %v2042, %v2040
    %v2055 = vpack.c.b16 %v2043, %v2041
    %v2056 = vpack.c.b16 %v2046, %v2044
    %v2057 = vpack.c.b16 %v2047, %v2045
    %v2069 = vsel %vm964, %v888, 0
    %2071 = vmatpush.bf16.msra.mxu0 0
    %2072 = vmatpush.bf16.msra.mxu0 0
    %2073 = vmatpush.bf16.msra.mxu0 0
    %2074 = vmatpush.bf16.msra.mxu0 %v2056
    %2075 = vmatpush.bf16.msra.mxu0 %v2054
    %2076 = vmatpush.bf16.msra.mxu0 %v2052
    %2077 = vmatpush.bf16.msra.mxu0 %v2050
    %2078 = vmatpush.bf16.msra.mxu0 %v2048
    %2079 = vmatmul.bf16.gmra.mxu0 %v2069
    %v2080 = vpop.f32.mrf.mxu0
    %v2081 = vadd.f32 0.0, %v2080
    %v2082 = vpop.f32.mrf.mxu0
    %2083 = vdwg.mxu0
    %2084 = vmatpush.bf16.msra.mxu0 0
    %2085 = vmatpush.bf16.msra.mxu0 0
    %2086 = vmatpush.bf16.msra.mxu0 0
    %2087 = vmatpush.bf16.msra.mxu0 %v2057
    %2088 = vmatpush.bf16.msra.mxu0 %v2055
    %2089 = vmatpush.bf16.msra.mxu0 %v2053
    %2090 = vmatpush.bf16.msra.mxu0 %v2051
    %2091 = vmatpush.bf16.msra.mxu0 %v2049
    %2092 = vmatmul.bf16.gmra.mxu0 %v2069
    %v2093 = vpop.f32.mrf.mxu0
    %v2094 = vadd.f32 0.0, %v2093
    %v2095 = vpop.f32.mrf.mxu0
    %2096 = vdwg.mxu0
    %v2097 = vadd.f32 %v2005, %v2081
    %v2098 = vadd.f32 %v2006, %v2094
    %s2099 = scalar_lea.vmem [#allocation7], 1040
    %v2100 = vld [vmem:[%s2099] sm:$0xff]
    %v2101 = vld [vmem:[%s2099 + $0x8] sm:$0xff]
    %v2102 = vld [vmem:[%s2099 + $0x10] sm:$0xff]
    %v2103 = vld [vmem:[%s2099 + $0x18] sm:$0xff]
    %v2104 = vld [vmem:[%s2099 + $0x20] sm:$0xff]
    %v2105 = vld [vmem:[%s2099 + $0x28] sm:$0xff]
    %v2106 = vld [vmem:[%s2099 + $0x30] sm:$0xff]
    %v2107 = vld [vmem:[%s2099 + $0x38] sm:$0xff]
    %v2108 = vld [vmem:[%s2099 + $0x40] sm:$0xff]
    %v2109 = vld [vmem:[%s2099 + $0x48] sm:$0xff]
    %v2111 = vunpack.c.l.b16 %v888
    %v2112 = vpack.c.b16 %v2111, %v2111
    %v2113 = vrot.slane %v2112, 1
    %v2124 = vunpack.c.l.b16 %v2100
    %v2125 = vunpack.c.h.b16 %v2100
    %v2126 = vunpack.c.l.b16 %v2101
    %v2127 = vunpack.c.h.b16 %v2101
    %v2128 = vunpack.c.l.b16 %v2102
    %v2129 = vunpack.c.h.b16 %v2102
    %v2130 = vunpack.c.l.b16 %v2103
    %v2131 = vunpack.c.h.b16 %v2103
    %v2132 = vunpack.c.l.b16 %v2104
    %v2133 = vunpack.c.h.b16 %v2104
    %v2134 = vunpack.c.l.b16 %v2105
    %v2135 = vunpack.c.h.b16 %v2105
    %v2136 = vunpack.c.l.b16 %v2106
    %v2137 = vunpack.c.h.b16 %v2106
    %v2138 = vunpack.c.l.b16 %v2107
    %v2139 = vunpack.c.h.b16 %v2107
    %v2140 = vunpack.c.l.b16 %v2108
    %v2141 = vunpack.c.h.b16 %v2108
    %v2142 = vunpack.c.l.b16 %v2109
    %v2143 = vunpack.c.h.b16 %v2109
    %v2144 = vpack.c.b16 %v2126, %v2124
    %v2145 = vpack.c.b16 %v2127, %v2125
    %v2146 = vpack.c.b16 %v2130, %v2128
    %v2147 = vpack.c.b16 %v2131, %v2129
    %v2148 = vpack.c.b16 %v2134, %v2132
    %v2149 = vpack.c.b16 %v2135, %v2133
    %v2150 = vpack.c.b16 %v2138, %v2136
    %v2151 = vpack.c.b16 %v2139, %v2137
    %v2152 = vpack.c.b16 %v2142, %v2140
    %v2153 = vpack.c.b16 %v2143, %v2141
    %v2165 = vsel %vm964, %v2113, 0
    %2167 = vmatpush.bf16.msra.mxu0 0
    %2168 = vmatpush.bf16.msra.mxu0 0
    %2169 = vmatpush.bf16.msra.mxu0 0
    %2170 = vmatpush.bf16.msra.mxu0 %v2152
    %2171 = vmatpush.bf16.msra.mxu0 %v2150
    %2172 = vmatpush.bf16.msra.mxu0 %v2148
    %2173 = vmatpush.bf16.msra.mxu0 %v2146
    %2174 = vmatpush.bf16.msra.mxu0 %v2144
    %2175 = vmatmul.bf16.gmra.mxu0 %v2165
    %v2176 = vpop.f32.mrf.mxu0
    %v2177 = vadd.f32 0.0, %v2176
    %v2178 = vpop.f32.mrf.mxu0
    %2179 = vdwg.mxu0
    %2180 = vmatpush.bf16.msra.mxu0 0
    %2181 = vmatpush.bf16.msra.mxu0 0
    %2182 = vmatpush.bf16.msra.mxu0 0
    %2183 = vmatpush.bf16.msra.mxu0 %v2153
    %2184 = vmatpush.bf16.msra.mxu0 %v2151
    %2185 = vmatpush.bf16.msra.mxu0 %v2149
    %2186 = vmatpush.bf16.msra.mxu0 %v2147
    %2187 = vmatpush.bf16.msra.mxu0 %v2145
    %2188 = vmatmul.bf16.gmra.mxu0 %v2165
    %v2189 = vpop.f32.mrf.mxu0
    %v2190 = vadd.f32 0.0, %v2189
    %v2191 = vpop.f32.mrf.mxu0
    %2192 = vdwg.mxu0
    %v2193 = vadd.f32 %v2097, %v2177
    %v2194 = vadd.f32 %v2098, %v2190
    %s2195 = scalar_lea.vmem [#allocation7], 1120
    %v2196 = vld [vmem:[%s2195] sm:$0xff]
    %v2197 = vld [vmem:[%s2195 + $0x8] sm:$0xff]
    %v2198 = vld [vmem:[%s2195 + $0x10] sm:$0xff]
    %v2199 = vld [vmem:[%s2195 + $0x18] sm:$0xff]
    %v2200 = vld [vmem:[%s2195 + $0x20] sm:$0xff]
    %v2201 = vld [vmem:[%s2195 + $0x28] sm:$0xff]
    %v2202 = vld [vmem:[%s2195 + $0x30] sm:$0xff]
    %v2203 = vld [vmem:[%s2195 + $0x38] sm:$0xff]
    %v2204 = vld [vmem:[%s2195 + $0x40] sm:$0xff]
    %v2205 = vld [vmem:[%s2195 + $0x48] sm:$0xff]
    %v2206 = vrot.slane %v2112, 2
    %v2217 = vunpack.c.l.b16 %v2196
    %v2218 = vunpack.c.h.b16 %v2196
    %v2219 = vunpack.c.l.b16 %v2197
    %v2220 = vunpack.c.h.b16 %v2197
    %v2221 = vunpack.c.l.b16 %v2198
    %v2222 = vunpack.c.h.b16 %v2198
    %v2223 = vunpack.c.l.b16 %v2199
    %v2224 = vunpack.c.h.b16 %v2199
    %v2225 = vunpack.c.l.b16 %v2200
    %v2226 = vunpack.c.h.b16 %v2200
    %v2227 = vunpack.c.l.b16 %v2201
    %v2228 = vunpack.c.h.b16 %v2201
    %v2229 = vunpack.c.l.b16 %v2202
    %v2230 = vunpack.c.h.b16 %v2202
    %v2231 = vunpack.c.l.b16 %v2203
    %v2232 = vunpack.c.h.b16 %v2203
    %v2233 = vunpack.c.l.b16 %v2204
    %v2234 = vunpack.c.h.b16 %v2204
    %v2235 = vunpack.c.l.b16 %v2205
    %v2236 = vunpack.c.h.b16 %v2205
    %v2237 = vpack.c.b16 %v2219, %v2217
    %v2238 = vpack.c.b16 %v2220, %v2218
    %v2239 = vpack.c.b16 %v2223, %v2221
    %v2240 = vpack.c.b16 %v2224, %v2222
    %v2241 = vpack.c.b16 %v2227, %v2225
    %v2242 = vpack.c.b16 %v2228, %v2226
    %v2243 = vpack.c.b16 %v2231, %v2229
    %v2244 = vpack.c.b16 %v2232, %v2230
    %v2245 = vpack.c.b16 %v2235, %v2233
    %v2246 = vpack.c.b16 %v2236, %v2234
    %v2258 = vsel %vm964, %v2206, 0
    %2260 = vmatpush.bf16.msra.mxu0 0
    %2261 = vmatpush.bf16.msra.mxu0 0
    %2262 = vmatpush.bf16.msra.mxu0 0
    %2263 = vmatpush.bf16.msra.mxu0 %v2245
    %2264 = vmatpush.bf16.msra.mxu0 %v2243
    %2265 = vmatpush.bf16.msra.mxu0 %v2241
    %2266 = vmatpush.bf16.msra.mxu0 %v2239
    %2267 = vmatpush.bf16.msra.mxu0 %v2237
    %2268 = vmatmul.bf16.gmra.mxu0 %v2258
    %v2269 = vpop.f32.mrf.mxu0
    %v2270 = vadd.f32 0.0, %v2269
    %v2271 = vpop.f32.mrf.mxu0
    %2272 = vdwg.mxu0
    %2273 = vmatpush.bf16.msra.mxu0 0
    %2274 = vmatpush.bf16.msra.mxu0 0
    %2275 = vmatpush.bf16.msra.mxu0 0
    %2276 = vmatpush.bf16.msra.mxu0 %v2246
    %2277 = vmatpush.bf16.msra.mxu0 %v2244
    %2278 = vmatpush.bf16.msra.mxu0 %v2242
    %2279 = vmatpush.bf16.msra.mxu0 %v2240
    %2280 = vmatpush.bf16.msra.mxu0 %v2238
    %2281 = vmatmul.bf16.gmra.mxu0 %v2258
    %v2282 = vpop.f32.mrf.mxu0
    %v2283 = vadd.f32 0.0, %v2282
    %v2284 = vpop.f32.mrf.mxu0
    %2285 = vdwg.mxu0
    %v2286 = vadd.f32 %v2193, %v2270
    %v2287 = vadd.f32 %v2194, %v2283
    %s2288 = scalar_lea.vmem [#allocation7], 1200
    %v2289 = vld [vmem:[%s2288] sm:$0xff]
    %v2290 = vld [vmem:[%s2288 + $0x8] sm:$0xff]
    %v2291 = vld [vmem:[%s2288 + $0x10] sm:$0xff]
    %v2292 = vld [vmem:[%s2288 + $0x18] sm:$0xff]
    %v2293 = vld [vmem:[%s2288 + $0x20] sm:$0xff]
    %v2294 = vld [vmem:[%s2288 + $0x28] sm:$0xff]
    %v2295 = vld [vmem:[%s2288 + $0x30] sm:$0xff]
    %v2296 = vld [vmem:[%s2288 + $0x38] sm:$0xff]
    %v2297 = vld [vmem:[%s2288 + $0x40] sm:$0xff]
    %v2298 = vld [vmem:[%s2288 + $0x48] sm:$0xff]
    %v2299 = vrot.slane %v2112, 3
    %v2310 = vunpack.c.l.b16 %v2289
    %v2311 = vunpack.c.h.b16 %v2289
    %v2312 = vunpack.c.l.b16 %v2290
    %v2313 = vunpack.c.h.b16 %v2290
    %v2314 = vunpack.c.l.b16 %v2291
    %v2315 = vunpack.c.h.b16 %v2291
    %v2316 = vunpack.c.l.b16 %v2292
    %v2317 = vunpack.c.h.b16 %v2292
    %v2318 = vunpack.c.l.b16 %v2293
    %v2319 = vunpack.c.h.b16 %v2293
    %v2320 = vunpack.c.l.b16 %v2294
    %v2321 = vunpack.c.h.b16 %v2294
    %v2322 = vunpack.c.l.b16 %v2295
    %v2323 = vunpack.c.h.b16 %v2295
    %v2324 = vunpack.c.l.b16 %v2296
    %v2325 = vunpack.c.h.b16 %v2296
    %v2326 = vunpack.c.l.b16 %v2297
    %v2327 = vunpack.c.h.b16 %v2297
    %v2328 = vunpack.c.l.b16 %v2298
    %v2329 = vunpack.c.h.b16 %v2298
    %v2330 = vpack.c.b16 %v2312, %v2310
    %v2331 = vpack.c.b16 %v2313, %v2311
    %v2332 = vpack.c.b16 %v2316, %v2314
    %v2333 = vpack.c.b16 %v2317, %v2315
    %v2334 = vpack.c.b16 %v2320, %v2318
    %v2335 = vpack.c.b16 %v2321, %v2319
    %v2336 = vpack.c.b16 %v2324, %v2322
    %v2337 = vpack.c.b16 %v2325, %v2323
    %v2338 = vpack.c.b16 %v2328, %v2326
    %v2339 = vpack.c.b16 %v2329, %v2327
    %v2351 = vsel %vm964, %v2299, 0
    %2353 = vmatpush.bf16.msra.mxu0 0
    %2354 = vmatpush.bf16.msra.mxu0 0
    %2355 = vmatpush.bf16.msra.mxu0 0
    %2356 = vmatpush.bf16.msra.mxu0 %v2338
    %2357 = vmatpush.bf16.msra.mxu0 %v2336
    %2358 = vmatpush.bf16.msra.mxu0 %v2334
    %2359 = vmatpush.bf16.msra.mxu0 %v2332
    %2360 = vmatpush.bf16.msra.mxu0 %v2330
    %2361 = vmatmul.bf16.gmra.mxu0 %v2351
    %v2362 = vpop.f32.mrf.mxu0
    %v2363 = vadd.f32 0.0, %v2362
    %v2364 = vpop.f32.mrf.mxu0
    %2365 = vdwg.mxu0
    %2366 = vmatpush.bf16.msra.mxu0 0
    %2367 = vmatpush.bf16.msra.mxu0 0
    %2368 = vmatpush.bf16.msra.mxu0 0
    %2369 = vmatpush.bf16.msra.mxu0 %v2339
    %2370 = vmatpush.bf16.msra.mxu0 %v2337
    %2371 = vmatpush.bf16.msra.mxu0 %v2335
    %2372 = vmatpush.bf16.msra.mxu0 %v2333
    %2373 = vmatpush.bf16.msra.mxu0 %v2331
    %2374 = vmatmul.bf16.gmra.mxu0 %v2351
    %v2375 = vpop.f32.mrf.mxu0
    %v2376 = vadd.f32 0.0, %v2375
    %v2377 = vpop.f32.mrf.mxu0
    %2378 = vdwg.mxu0
    %v2379 = vadd.f32 %v2286, %v2363
    %v2380 = vadd.f32 %v2287, %v2376
    %v2381 = vld [vmem:[%s8] sm:$0x3]
    %v2383 = vperm.slane %v2381, 0
    %v2384 = vperm.slane %v2381, 1
    %v2387 = vadd.f32 %v2379, %v2383
    %v2388 = vadd.f32 %v2380, %v2384
    %v2389 = vmax.f32 %v2387, 0.0
    %v2390 = vmax.f32 %v2388, 0.0
    %v2391 = vpack.c.bf16 %v2389, %v2389
    %v2392 = vpack.c.bf16 %v2390, %v2390
    %v2393 = vld [vmem:[%s9] sm:$0xf]
    %v2394 = vld [vmem:[%s9 + $0x4] sm:$0xf]
    %v2395 = vld [vmem:[%s9 + $0x8] sm:$0xf]
    %v2396 = vld [vmem:[%s9 + $0xc] sm:$0xf]
    %v2397 = vld [vmem:[%s9 + $0x10] sm:$0xf]
    %v2398 = vld [vmem:[%s9 + $0x14] sm:$0xf]
    %v2399 = vld [vmem:[%s9 + $0x18] sm:$0xf]
    %v2400 = vld [vmem:[%s9 + $0x1c] sm:$0xf]
    %v2401 = vld [vmem:[%s9 + $0x20] sm:$0xf]
    %v2402 = vld [vmem:[%s9 + $0x24] sm:$0xf]
    %v2403 = vld [vmem:[%s9 + $0x28] sm:$0xf]
    %v2404 = vld [vmem:[%s9 + $0x2c] sm:$0xf]
    %v2405 = vld [vmem:[%s9 + $0x30] sm:$0xf]
    %v2406 = vld [vmem:[%s9 + $0x34] sm:$0xf]
    %v2407 = vld [vmem:[%s9 + $0x38] sm:$0xf]
    %v2408 = vld [vmem:[%s9 + $0x3c] sm:$0xf]
    %v2409 = vld [vmem:[%s9 + $0x40] sm:$0xf]
    %v2410 = vld [vmem:[%s9 + $0x44] sm:$0xf]
    %v2411 = vld [vmem:[%s9 + $0x48] sm:$0xf]
    %v2412 = vld [vmem:[%s9 + $0x4c] sm:$0xf]
    %v2413 = vld [vmem:[%s9 + $0x50] sm:$0xf]
    %v2414 = vld [vmem:[%s9 + $0x54] sm:$0xf]
    %v2415 = vld [vmem:[%s9 + $0x58] sm:$0xf]
    %v2416 = vld [vmem:[%s9 + $0x5c] sm:$0xf]
    %v2417 = vld [vmem:[%s9 + $0x60] sm:$0xf]
    %v2418 = vld [vmem:[%s9 + $0x64] sm:$0xf]
    %v2419 = vld [vmem:[%s9 + $0x68] sm:$0xf]
    %v2420 = vld [vmem:[%s9 + $0x6c] sm:$0xf]
    %v2421 = vld [vmem:[%s9 + $0x70] sm:$0xf]
    %v2422 = vld [vmem:[%s9 + $0x74] sm:$0xf]
    %v2423 = vld [vmem:[%s9 + $0x78] sm:$0xf]
    %v2424 = vld [vmem:[%s9 + $0x7c] sm:$0xf]
    %v2425 = vld [vmem:[%s10] sm:$0x1]
    %v2427 = vperm.slane %v2425, 0
    %v2461 = vunpack.c.l.b16 %v2393
    %v2462 = vunpack.c.l.b16 %v2394
    %v2463 = vunpack.c.l.b16 %v2395
    %v2464 = vunpack.c.l.b16 %v2396
    %v2465 = vunpack.c.l.b16 %v2397
    %v2466 = vunpack.c.l.b16 %v2398
    %v2467 = vunpack.c.l.b16 %v2399
    %v2468 = vunpack.c.l.b16 %v2400
    %v2469 = vunpack.c.l.b16 %v2401
    %v2470 = vunpack.c.l.b16 %v2402
    %v2471 = vunpack.c.l.b16 %v2403
    %v2472 = vunpack.c.l.b16 %v2404
    %v2473 = vunpack.c.l.b16 %v2405
    %v2474 = vunpack.c.l.b16 %v2406
    %v2475 = vunpack.c.l.b16 %v2407
    %v2476 = vunpack.c.l.b16 %v2408
    %v2477 = vunpack.c.l.b16 %v2409
    %v2478 = vunpack.c.l.b16 %v2410
    %v2479 = vunpack.c.l.b16 %v2411
    %v2480 = vunpack.c.l.b16 %v2412
    %v2481 = vunpack.c.l.b16 %v2413
    %v2482 = vunpack.c.l.b16 %v2414
    %v2483 = vunpack.c.l.b16 %v2415
    %v2484 = vunpack.c.l.b16 %v2416
    %v2485 = vunpack.c.l.b16 %v2417
    %v2486 = vunpack.c.l.b16 %v2418
    %v2487 = vunpack.c.l.b16 %v2419
    %v2488 = vunpack.c.l.b16 %v2420
    %v2489 = vunpack.c.l.b16 %v2421
    %v2490 = vunpack.c.l.b16 %v2422
    %v2491 = vunpack.c.l.b16 %v2423
    %v2492 = vunpack.c.l.b16 %v2424
    %v2493 = vpack.c.b16 %v2462, %v2461
    %v2494 = vpack.c.b16 %v2464, %v2463
    %v2495 = vpack.c.b16 %v2466, %v2465
    %v2496 = vpack.c.b16 %v2468, %v2467
    %v2497 = vpack.c.b16 %v2470, %v2469
    %v2498 = vpack.c.b16 %v2472, %v2471
    %v2499 = vpack.c.b16 %v2474, %v2473
    %v2500 = vpack.c.b16 %v2476, %v2475
    %v2501 = vpack.c.b16 %v2478, %v2477
    %v2502 = vpack.c.b16 %v2480, %v2479
    %v2503 = vpack.c.b16 %v2482, %v2481
    %v2504 = vpack.c.b16 %v2484, %v2483
    %v2505 = vpack.c.b16 %v2486, %v2485
    %v2506 = vpack.c.b16 %v2488, %v2487
    %v2507 = vpack.c.b16 %v2490, %v2489
    %v2508 = vpack.c.b16 %v2492, %v2491
    %2525 = vmatpush.bf16.msra.mxu0 %v2500
    %2526 = vmatpush.bf16.msra.mxu0 %v2499
    %2527 = vmatpush.bf16.msra.mxu0 %v2498
    %2528 = vmatpush.bf16.msra.mxu0 %v2497
    %2529 = vmatpush.bf16.msra.mxu0 %v2496
    %2530 = vmatpush.bf16.msra.mxu0 %v2495
    %2531 = vmatpush.bf16.msra.mxu0 %v2494
    %2532 = vmatpush.bf16.msra.mxu0 %v2493
    %2533 = vmatmul.bf16.gmra.mxu0 %v2391
    %v2534 = vpop.f32.mrf.mxu0
    %v2535 = vadd.f32 %v2427, %v2534
    %v2536 = vpop.f32.mrf.mxu0
    %2537 = vdwg.mxu0
    %2538 = vmatpush.bf16.msra.mxu0 %v2508
    %2539 = vmatpush.bf16.msra.mxu0 %v2507
    %2540 = vmatpush.bf16.msra.mxu0 %v2506
    %2541 = vmatpush.bf16.msra.mxu0 %v2505
    %2542 = vmatpush.bf16.msra.mxu0 %v2504
    %2543 = vmatpush.bf16.msra.mxu0 %v2503
    %2544 = vmatpush.bf16.msra.mxu0 %v2502
    %2545 = vmatpush.bf16.msra.mxu0 %v2501
    %2546 = vmatmul.bf16.gmra.mxu0 %v2392
    %v2547 = vpop.f32.mrf.mxu0
    %v2548 = vadd.f32 %v2535, %v2547
    %v2549 = vpop.f32.mrf.mxu0
    %2550 = vdwg.mxu0
    %2551 = vst [vmem:[#allocation8] sm:$0x3] %v2548
    // Predicated region
    $region58: #{tpu_custom_call.1} parent=1 // pred_check
      _
    $region59: #{tpu_custom_call.1} parent=1 // pred_check_branch
      %2553 = sbr.rel (0) target = $region61
    $region60: #{tpu_custom_call.1} parent=1 // pred_region
      %2555 = vsyncadd [#allocation4], 0
      %s2557 = sshll.u32 [#allocation8], 4
      %s2558 = int_to_ptr.vmem [resolvable:$true] %s2557
      %s2559 = sshll.u32 %s11, 4
      %s2560 = int_to_ptr.hbm [resolvable:$true] %s2559
      %2562 = dma.vmem_to_hbm [thread:$0]  %s2558, 32, %s2560, [#allocation4]
    $region61: #{tpu_custom_call.1} parent=1 // pred_fallthru
      _
    // Predicated region
    $region62: #{tpu_custom_call.1} parent=1 // pred_check
      _
    $region63: #{tpu_custom_call.1} parent=1 // pred_check_branch
      %2564 = sbr.rel (0) target = $region65
    $region64: #{tpu_custom_call.1} parent=1 // pred_region
      %2566 = dma.done [#allocation4], 32
    $region65: #{tpu_custom_call.1} parent=1 // pred_fallthru
      _
    %2567 = vsyncpa [#allocation3], 1
    %2568 = vsyncpa [#allocation6], 1
    %2569 = vsyncpa [#allocation4], 1

</llo_original>
